<compile_context>
chip_gen: v7x
topology: tpu7x:2x2x1
jax: 0.10.0
libtpu: 0.0.40
codegen_flags: <defaults>
</compile_context>

<pallas_src>
import math

import jax
import jax.numpy as jnp
from jax.experimental import pallas as pl
from jax.experimental.pallas import tpu as pltpu

N_EMBD = 256
HIDDEN = 4 * N_EMBD   # 1024
SEQ_LEN = 16
BATCH = 2


# ---------------------------------------------------------------------------
# Fused FFN kernel: single invocation over the flattened (B*T, C) rows.
#   h = relu(x @ W1 + b1) ; y = h @ W2 + b2
# Weights arrive as bf16, accumulation and elementwise work are f32.
# ---------------------------------------------------------------------------
def ffn_kernel(x_ref, w1_ref, b1_ref, w2_ref, b2_ref, o_ref):
    x = x_ref[...]                                                # (R, C) f32

    # First linear + ReLU: bf16 operands on the MXU, f32 accumulation.
    h = jnp.dot(x.astype(jnp.bfloat16), w1_ref[...],
                preferred_element_type=jnp.float32)               # (R, 4C) f32
    h = jnp.maximum(h + b1_ref[...], 0.0)                         # bias + ReLU in f32

    # Second linear.
    y = jnp.dot(h.astype(jnp.bfloat16), w2_ref[...],
                preferred_element_type=jnp.float32)               # (R, C) f32
    y = y + b2_ref[...]

    # (dropout is identity in eval mode)
    o_ref[...] = y.astype(o_ref.dtype)                            # lane-dense (32, 256) store


# ---------------------------------------------------------------------------
# Wrapper: flatten (B, T) -> rows, single pallas_call, no grid.
# ---------------------------------------------------------------------------
@jax.jit
def feed_forward(x, w1_bf16, b1, w2_bf16, b2):
    B, T, C = x.shape
    Hid = w1_bf16.shape[1]
    R = B * T
    x2d = x.reshape(R, C)

    y2d = pl.pallas_call(
        ffn_kernel,
        out_shape=jax.ShapeDtypeStruct((R, C), x.dtype),
        in_specs=[
            pl.BlockSpec(memory_space=pltpu.MemorySpace.VMEM),    # x   (R, C)   f32
            pl.BlockSpec(memory_space=pltpu.MemorySpace.VMEM),    # W1  (C, 4C)  bf16
            pl.BlockSpec(memory_space=pltpu.MemorySpace.VMEM),    # b1  (1, 4C)  f32
            pl.BlockSpec(memory_space=pltpu.MemorySpace.VMEM),    # W2  (4C, C)  bf16
            pl.BlockSpec(memory_space=pltpu.MemorySpace.VMEM),    # b2  (1, C)   f32
        ],
        out_specs=pl.BlockSpec(memory_space=pltpu.MemorySpace.VMEM),
    )(x2d, w1_bf16, b1, w2_bf16, b2)

    return y2d.reshape(B, T, C)


# ---------------------------------------------------------------------------
# Pure-JAX reference (same mixed precision: bf16 matmul operands, f32 accum).
# ---------------------------------------------------------------------------
def reference(x, w1_bf16, b1, w2_bf16, b2):
    h = jnp.dot(x.astype(jnp.bfloat16), w1_bf16,
                preferred_element_type=jnp.float32) + b1
    h = jnp.maximum(h, 0.0)
    y = jnp.dot(h.astype(jnp.bfloat16), w2_bf16,
                preferred_element_type=jnp.float32) + b2
    return y


if __name__ == "__main__":
    key = jax.random.PRNGKey(0)
    k_x, k_w1, k_b1, k_w2, k_b2 = jax.random.split(key, 5)

    B, T, C, Hid = BATCH, SEQ_LEN, N_EMBD, HIDDEN

    x = jax.random.normal(k_x, (B, T, C), dtype=jnp.float32)
    # deterministic synthetic parameters (scaled like nn.Linear init);
    # weights stored bf16 in HBM, biases f32.
    w1 = (jax.random.normal(k_w1, (C, Hid), dtype=jnp.float32)
          * (1.0 / math.sqrt(C))).astype(jnp.bfloat16)
    b1 = jax.random.normal(k_b1, (1, Hid), dtype=jnp.float32) * 0.01
    w2 = (jax.random.normal(k_w2, (Hid, C), dtype=jnp.float32)
          * (1.0 / math.sqrt(Hid))).astype(jnp.bfloat16)
    b2 = jax.random.normal(k_b2, (1, C), dtype=jnp.float32) * 0.01

    out = feed_forward(x, w1, b1, w2, b2)
    out = jax.block_until_ready(out)

    ref = reference(x.reshape(B * T, C), w1, b1, w2, b2).reshape(B, T, C)
    assert out.shape == (B, T, C)
    assert out.dtype == x.dtype
    assert jnp.allclose(out, ref, atol=1e-2, rtol=1e-2), "mismatch vs reference"

    print("KERNEL_OK")
</pallas_src>

<mosaic_0001>
module attributes {stable_mosaic.version = 11 : i64} {
  func.func @ffn_kernel(%arg0: memref<32x256xf32, #tpu.memory_space<vmem>>, %arg1: memref<256x1024xbf16, #tpu.memory_space<vmem>>, %arg2: memref<1x1024xf32, #tpu.memory_space<vmem>>, %arg3: memref<1024x256xbf16, #tpu.memory_space<vmem>>, %arg4: memref<1x256xf32, #tpu.memory_space<vmem>>, %arg5: memref<32x256xf32, #tpu.memory_space<vmem>>) attributes {dimension_semantics = [], scalar_prefetch = 0 : i64, scratch_operands = 0 : i64, tpu.core_type = #tpu.core_type<tc>} {
    %c0 = arith.constant 0 : index
    %c0_0 = arith.constant 0 : index
    %0 = vector.load %arg0[%c0, %c0_0] : memref<32x256xf32, #tpu.memory_space<vmem>>, vector<32x256xf32>
    %1 = arith.truncf %0 : vector<32x256xf32> to vector<32x256xbf16>
    %c0_1 = arith.constant 0 : index
    %c0_2 = arith.constant 0 : index
    %2 = vector.load %arg1[%c0_1, %c0_2] : memref<256x1024xbf16, #tpu.memory_space<vmem>>, vector<256x1024xbf16>
    %cst = arith.constant dense<0.000000e+00> : vector<32x1024xf32>
    %3 = tpu.matmul %1, %2, %cst {dimension_numbers = #tpu.dot_dimension_numbers<[1], [0], [0], [1], [0, 0, 1, 1], [], []>} : vector<32x256xbf16>, vector<256x1024xbf16>, vector<32x1024xf32> -> vector<32x1024xf32>
    %c0_3 = arith.constant 0 : index
    %c0_4 = arith.constant 0 : index
    %4 = vector.load %arg2[%c0_3, %c0_4] : memref<1x1024xf32, #tpu.memory_space<vmem>>, vector<1x1024xf32>
    %5 = vector.broadcast %4 : vector<1x1024xf32> to vector<32x1024xf32>
    %6 = arith.addf %3, %5 : vector<32x1024xf32>
    %cst_5 = arith.constant 0.000000e+00 : f32
    %7 = vector.broadcast %cst_5 : f32 to vector<32x1024xf32>
    %8 = arith.maximumf %6, %7 : vector<32x1024xf32>
    %9 = arith.truncf %8 : vector<32x1024xf32> to vector<32x1024xbf16>
    %c0_6 = arith.constant 0 : index
    %c0_7 = arith.constant 0 : index
    %10 = vector.load %arg3[%c0_6, %c0_7] : memref<1024x256xbf16, #tpu.memory_space<vmem>>, vector<1024x256xbf16>
    %cst_8 = arith.constant dense<0.000000e+00> : vector<32x256xf32>
    %11 = tpu.matmul %9, %10, %cst_8 {dimension_numbers = #tpu.dot_dimension_numbers<[1], [0], [0], [1], [0, 0, 1, 1], [], []>} : vector<32x1024xbf16>, vector<1024x256xbf16>, vector<32x256xf32> -> vector<32x256xf32>
    %c0_9 = arith.constant 0 : index
    %c0_10 = arith.constant 0 : index
    %12 = vector.load %arg4[%c0_9, %c0_10] : memref<1x256xf32, #tpu.memory_space<vmem>>, vector<1x256xf32>
    %13 = vector.broadcast %12 : vector<1x256xf32> to vector<32x256xf32>
    %14 = arith.addf %11, %13 : vector<32x256xf32>
    %c0_11 = arith.constant 0 : index
    %c0_12 = arith.constant 0 : index
    %15 = vector.load %arg5[%c0_11, %c0_12] : memref<32x256xf32, #tpu.memory_space<vmem>>, vector<32x256xf32>
    tpu.vector_store %arg5[%c0_11, %c0_12], %14 {strides = array<i32>} : memref<32x256xf32, #tpu.memory_space<vmem>>, vector<32x256xf32>,
    return
  }
}

</mosaic_0001>

<llo_original>
// kernel: feed_forward.1
$region0: #{feed_forward.1}
  #allocation0 [shape = 'u32[]', space=smem, size = 0x4, offset = 0x4, fixed_abs, tag = 'smem constant byte address 0x4 - core index']
  #allocation1 [shape = 'u32[144,128]{1,0:T(1,128)}', space=vmem, size = 0x12000, scoped, tag = 'internal scratch']
  %s0 = inlined_call_operand.hbm [shape: f32[32,256], index: 0, kind: input, shape index: {}]
  %s1 = inlined_call_operand.hbm [shape: bf16[256,1024], index: 1, kind: input, shape index: {}]
  %s2 = inlined_call_operand.vmem [shape: f32[1,1024], index: 2, kind: input, shape index: {}]
  %s3 = inlined_call_operand.hbm [shape: bf16[1024,256], index: 3, kind: input, shape index: {}]
  %s4 = inlined_call_operand.vmem [shape: f32[1,256], index: 4, kind: input, shape index: {}]
  %s5 = inlined_call_operand.hbm [shape: f32[32,256], index: 5, kind: output, shape index: {}]
  %s6 = sld [smem:[#allocation0]]
  $region42: #{feed_forward.1} parent=0
    _
  %s8 = ssub.s32 1, %s6
  %s9 = scalar_select 0, %s8, %s6
  $region1: #{feed_forward.1} parent=0
    #allocation2 [shape = 'u8[32768]{0}', space=vmem, size = 0x8000, scoped, tag = 'input window, operand 0, single buffered']
    #allocation3 [shape = 's32[1]{0}', space=sflag, size = 0x4, scoped, tag = 'scoped memory for feed_forward.1']
    #allocation4 [shape = 's32[1]{0}', space=sflag, size = 0x4, scoped, tag = 'scoped memory for feed_forward.1']
    #allocation5 [shape = 'u8[524288]{0}', space=vmem, size = 0x80000, scoped, tag = 'input window, operand 1, single buffered']
    #allocation6 [shape = 's32[1]{0}', space=sflag, size = 0x4, scoped, tag = 'scoped memory for feed_forward.1']
    #allocation7 [shape = 'u8[524288]{0}', space=vmem, size = 0x80000, scoped, tag = 'input window, operand 3, single buffered']
    #allocation8 [shape = 'u8[32768]{0}', space=vmem, size = 0x8000, scoped, tag = 'output window, operand 0, single buffered']
    %10 = vsyncpa [#allocation3], 0
    %11 = vsyncpa [#allocation6], 0
    %12 = vsyncpa [#allocation4], 0
    // Predicated region
    $region2: #{feed_forward.1} parent=1 // pred_check
      _
    $region3: #{feed_forward.1} parent=1 // pred_check_branch
      %14 = sbr.rel (0) target = $region5
    $region4: #{feed_forward.1} parent=1 // pred_region
      %s16 = ssub.s32 1024, 1024
      %17 = vsyncadd [#allocation3], %s16
      %s18 = sshll.u32 [#allocation2], 4
      %s19 = int_to_ptr.vmem [resolvable:$true] %s18
      %24 = dma.hbm_to_vmem [thread:$0]  %s0, 1024, %s19, [#allocation3], 256, 256, 16
    $region5: #{feed_forward.1} parent=1 // pred_fallthru
      _
    // Predicated region
    $region6: #{feed_forward.1} parent=1 // pred_check
      _
    $region7: #{feed_forward.1} parent=1 // pred_check_branch
      %26 = sbr.rel (0) target = $region9
    $region8: #{feed_forward.1} parent=1 // pred_region
      %s28 = ssub.s32 16384, 16384
      %29 = vsyncadd [#allocation6], %s28
      %s30 = sshll.u32 [#allocation5], 4
      %s31 = int_to_ptr.vmem [resolvable:$true] %s30
      %36 = dma.hbm_to_vmem [thread:$0]  %s1, 16384, %s31, [#allocation6], 512, 512, 32
    $region9: #{feed_forward.1} parent=1 // pred_fallthru
      _
    // Predicated region
    $region10: #{feed_forward.1} parent=1 // pred_check
      _
    $region11: #{feed_forward.1} parent=1 // pred_check_branch
      %38 = sbr.rel (0) target = $region13
    $region12: #{feed_forward.1} parent=1 // pred_region
      _
    $region13: #{feed_forward.1} parent=1 // pred_fallthru
      _
    // Predicated region
    $region14: #{feed_forward.1} parent=1 // pred_check
      _
    $region15: #{feed_forward.1} parent=1 // pred_check_branch
      %40 = sbr.rel (0) target = $region17
    $region16: #{feed_forward.1} parent=1 // pred_region
      %s42 = ssub.s32 16384, 16384
      %43 = vsyncadd [#allocation6], %s42
      %s44 = sshll.u32 [#allocation7], 4
      %s45 = int_to_ptr.vmem [resolvable:$true] %s44
      %50 = dma.hbm_to_vmem [thread:$0]  %s3, 16384, %s45, [#allocation6], 128, 128, 8
    $region17: #{feed_forward.1} parent=1 // pred_fallthru
      _
    // Predicated region
    $region18: #{feed_forward.1} parent=1 // pred_check
      _
    $region19: #{feed_forward.1} parent=1 // pred_check_branch
      %52 = sbr.rel (0) target = $region21
    $region20: #{feed_forward.1} parent=1 // pred_region
      _
    $region21: #{feed_forward.1} parent=1 // pred_fallthru
      _
    // Predicated region
    $region22: #{feed_forward.1} parent=1 // pred_check
      _
    $region23: #{feed_forward.1} parent=1 // pred_check_branch
      %54 = sbr.rel (0) target = $region25
    $region24: #{feed_forward.1} parent=1 // pred_region
      %55 = dma.done [#allocation3], 1024
    $region25: #{feed_forward.1} parent=1 // pred_fallthru
      _
    // Predicated region
    $region26: #{feed_forward.1} parent=1 // pred_check
      _
    $region27: #{feed_forward.1} parent=1 // pred_check_branch
      %57 = sbr.rel (0) target = $region29
    $region28: #{feed_forward.1} parent=1 // pred_region
      %58 = dma.done [#allocation6], 16384
    $region29: #{feed_forward.1} parent=1 // pred_fallthru
      _
    // Predicated region
    $region30: #{feed_forward.1} parent=1 // pred_check
      _
    $region31: #{feed_forward.1} parent=1 // pred_check_branch
      %60 = sbr.rel (0) target = $region33
    $region32: #{feed_forward.1} parent=1 // pred_region
      %61 = dma.done [#allocation6], 16384
    $region33: #{feed_forward.1} parent=1 // pred_fallthru
      _
    %v62 = vld [vmem:[#allocation2] sm:$0xff]
    %v63 = vld [vmem:[#allocation2 + $0x8] sm:$0xff]
    %v64 = vld [vmem:[#allocation2 + $0x10] sm:$0xff]
    %v65 = vld [vmem:[#allocation2 + $0x18] sm:$0xff]
    %v66 = vld [vmem:[#allocation2 + $0x20] sm:$0xff]
    %v67 = vld [vmem:[#allocation2 + $0x28] sm:$0xff]
    %v68 = vld [vmem:[#allocation2 + $0x30] sm:$0xff]
    %v69 = vld [vmem:[#allocation2 + $0x38] sm:$0xff]
    %v70 = vpack.c.bf16 %v64, %v62
    %v71 = vpack.c.bf16 %v65, %v63
    %v72 = vpack.c.bf16 %v68, %v66
    %v73 = vpack.c.bf16 %v69, %v67
    %v74 = vld [vmem:[#allocation5] sm:$0xff]
    %v75 = vld [vmem:[#allocation5 + $0x8] sm:$0xff]
    %v76 = vld [vmem:[#allocation5 + $0x10] sm:$0xff]
    %v77 = vld [vmem:[#allocation5 + $0x18] sm:$0xff]
    %v78 = vld [vmem:[#allocation5 + $0x20] sm:$0xff]
    %v79 = vld [vmem:[#allocation5 + $0x28] sm:$0xff]
    %v80 = vld [vmem:[#allocation5 + $0x30] sm:$0xff]
    %v81 = vld [vmem:[#allocation5 + $0x38] sm:$0xff]
    %v82 = vld [vmem:[#allocation5 + $0x40] sm:$0xff]
    %v83 = vld [vmem:[#allocation5 + $0x48] sm:$0xff]
    %v84 = vld [vmem:[#allocation5 + $0x50] sm:$0xff]
    %v85 = vld [vmem:[#allocation5 + $0x58] sm:$0xff]
    %v86 = vld [vmem:[#allocation5 + $0x60] sm:$0xff]
    %v87 = vld [vmem:[#allocation5 + $0x68] sm:$0xff]
    %v88 = vld [vmem:[#allocation5 + $0x70] sm:$0xff]
    %v89 = vld [vmem:[#allocation5 + $0x78] sm:$0xff]
    %v90 = vld [vmem:[#allocation5 + $0x80] sm:$0xff]
    %v91 = vld [vmem:[#allocation5 + $0x88] sm:$0xff]
    %v92 = vld [vmem:[#allocation5 + $0x90] sm:$0xff]
    %v93 = vld [vmem:[#allocation5 + $0x98] sm:$0xff]
    %v94 = vld [vmem:[#allocation5 + $0xa0] sm:$0xff]
    %v95 = vld [vmem:[#allocation5 + $0xa8] sm:$0xff]
    %v96 = vld [vmem:[#allocation5 + $0xb0] sm:$0xff]
    %v97 = vld [vmem:[#allocation5 + $0xb8] sm:$0xff]
    %v98 = vld [vmem:[#allocation5 + $0xc0] sm:$0xff]
    %v99 = vld [vmem:[#allocation5 + $0xc8] sm:$0xff]
    %v100 = vld [vmem:[#allocation5 + $0xd0] sm:$0xff]
    %v101 = vld [vmem:[#allocation5 + $0xd8] sm:$0xff]
    %v102 = vld [vmem:[#allocation5 + $0xe0] sm:$0xff]
    %v103 = vld [vmem:[#allocation5 + $0xe8] sm:$0xff]
    %v104 = vld [vmem:[#allocation5 + $0xf0] sm:$0xff]
    %v105 = vld [vmem:[#allocation5 + $0xf8] sm:$0xff]
    %v106 = vld [vmem:[#allocation5 + $0x100] sm:$0xff]
    %v107 = vld [vmem:[#allocation5 + $0x108] sm:$0xff]
    %v108 = vld [vmem:[#allocation5 + $0x110] sm:$0xff]
    %v109 = vld [vmem:[#allocation5 + $0x118] sm:$0xff]
    %v110 = vld [vmem:[#allocation5 + $0x120] sm:$0xff]
    %v111 = vld [vmem:[#allocation5 + $0x128] sm:$0xff]
    %v112 = vld [vmem:[#allocation5 + $0x130] sm:$0xff]
    %v113 = vld [vmem:[#allocation5 + $0x138] sm:$0xff]
    %v114 = vld [vmem:[#allocation5 + $0x140] sm:$0xff]
    %v115 = vld [vmem:[#allocation5 + $0x148] sm:$0xff]
    %v116 = vld [vmem:[#allocation5 + $0x150] sm:$0xff]
    %v117 = vld [vmem:[#allocation5 + $0x158] sm:$0xff]
    %v118 = vld [vmem:[#allocation5 + $0x160] sm:$0xff]
    %v119 = vld [vmem:[#allocation5 + $0x168] sm:$0xff]
    %v120 = vld [vmem:[#allocation5 + $0x170] sm:$0xff]
    %v121 = vld [vmem:[#allocation5 + $0x178] sm:$0xff]
    %v122 = vld [vmem:[#allocation5 + $0x180] sm:$0xff]
    %v123 = vld [vmem:[#allocation5 + $0x188] sm:$0xff]
    %v124 = vld [vmem:[#allocation5 + $0x190] sm:$0xff]
    %v125 = vld [vmem:[#allocation5 + $0x198] sm:$0xff]
    %v126 = vld [vmem:[#allocation5 + $0x1a0] sm:$0xff]
    %v127 = vld [vmem:[#allocation5 + $0x1a8] sm:$0xff]
    %v128 = vld [vmem:[#allocation5 + $0x1b0] sm:$0xff]
    %v129 = vld [vmem:[#allocation5 + $0x1b8] sm:$0xff]
    %v130 = vld [vmem:[#allocation5 + $0x1c0] sm:$0xff]
    %v131 = vld [vmem:[#allocation5 + $0x1c8] sm:$0xff]
    %v132 = vld [vmem:[#allocation5 + $0x1d0] sm:$0xff]
    %v133 = vld [vmem:[#allocation5 + $0x1d8] sm:$0xff]
    %v134 = vld [vmem:[#allocation5 + $0x1e0] sm:$0xff]
    %v135 = vld [vmem:[#allocation5 + $0x1e8] sm:$0xff]
    %v136 = vld [vmem:[#allocation5 + $0x1f0] sm:$0xff]
    %v137 = vld [vmem:[#allocation5 + $0x1f8] sm:$0xff]
    %v138 = vld [vmem:[#allocation5 + $0x200] sm:$0xff]
    %v139 = vld [vmem:[#allocation5 + $0x208] sm:$0xff]
    %v140 = vld [vmem:[#allocation5 + $0x210] sm:$0xff]
    %v141 = vld [vmem:[#allocation5 + $0x218] sm:$0xff]
    %v142 = vld [vmem:[#allocation5 + $0x220] sm:$0xff]
    %v143 = vld [vmem:[#allocation5 + $0x228] sm:$0xff]
    %v144 = vld [vmem:[#allocation5 + $0x230] sm:$0xff]
    %v145 = vld [vmem:[#allocation5 + $0x238] sm:$0xff]
    %v146 = vld [vmem:[#allocation5 + $0x240] sm:$0xff]
    %v147 = vld [vmem:[#allocation5 + $0x248] sm:$0xff]
    %v148 = vld [vmem:[#allocation5 + $0x250] sm:$0xff]
    %v149 = vld [vmem:[#allocation5 + $0x258] sm:$0xff]
    %v150 = vld [vmem:[#allocation5 + $0x260] sm:$0xff]
    %v151 = vld [vmem:[#allocation5 + $0x268] sm:$0xff]
    %v152 = vld [vmem:[#allocation5 + $0x270] sm:$0xff]
    %v153 = vld [vmem:[#allocation5 + $0x278] sm:$0xff]
    %v154 = vld [vmem:[#allocation5 + $0x280] sm:$0xff]
    %v155 = vld [vmem:[#allocation5 + $0x288] sm:$0xff]
    %v156 = vld [vmem:[#allocation5 + $0x290] sm:$0xff]
    %v157 = vld [vmem:[#allocation5 + $0x298] sm:$0xff]
    %v158 = vld [vmem:[#allocation5 + $0x2a0] sm:$0xff]
    %v159 = vld [vmem:[#allocation5 + $0x2a8] sm:$0xff]
    %v160 = vld [vmem:[#allocation5 + $0x2b0] sm:$0xff]
    %v161 = vld [vmem:[#allocation5 + $0x2b8] sm:$0xff]
    %v162 = vld [vmem:[#allocation5 + $0x2c0] sm:$0xff]
    %v163 = vld [vmem:[#allocation5 + $0x2c8] sm:$0xff]
    %v164 = vld [vmem:[#allocation5 + $0x2d0] sm:$0xff]
    %v165 = vld [vmem:[#allocation5 + $0x2d8] sm:$0xff]
    %v166 = vld [vmem:[#allocation5 + $0x2e0] sm:$0xff]
    %v167 = vld [vmem:[#allocation5 + $0x2e8] sm:$0xff]
    %v168 = vld [vmem:[#allocation5 + $0x2f0] sm:$0xff]
    %v169 = vld [vmem:[#allocation5 + $0x2f8] sm:$0xff]
    %v170 = vld [vmem:[#allocation5 + $0x300] sm:$0xff]
    %v171 = vld [vmem:[#allocation5 + $0x308] sm:$0xff]
    %v172 = vld [vmem:[#allocation5 + $0x310] sm:$0xff]
    %v173 = vld [vmem:[#allocation5 + $0x318] sm:$0xff]
    %v174 = vld [vmem:[#allocation5 + $0x320] sm:$0xff]
    %v175 = vld [vmem:[#allocation5 + $0x328] sm:$0xff]
    %v176 = vld [vmem:[#allocation5 + $0x330] sm:$0xff]
    %v177 = vld [vmem:[#allocation5 + $0x338] sm:$0xff]
    %v178 = vld [vmem:[#allocation5 + $0x340] sm:$0xff]
    %v179 = vld [vmem:[#allocation5 + $0x348] sm:$0xff]
    %v180 = vld [vmem:[#allocation5 + $0x350] sm:$0xff]
    %v181 = vld [vmem:[#allocation5 + $0x358] sm:$0xff]
    %v182 = vld [vmem:[#allocation5 + $0x360] sm:$0xff]
    %v183 = vld [vmem:[#allocation5 + $0x368] sm:$0xff]
    %v184 = vld [vmem:[#allocation5 + $0x370] sm:$0xff]
    %v185 = vld [vmem:[#allocation5 + $0x378] sm:$0xff]
    %v186 = vld [vmem:[#allocation5 + $0x380] sm:$0xff]
    %v187 = vld [vmem:[#allocation5 + $0x388] sm:$0xff]
    %v188 = vld [vmem:[#allocation5 + $0x390] sm:$0xff]
    %v189 = vld [vmem:[#allocation5 + $0x398] sm:$0xff]
    %v190 = vld [vmem:[#allocation5 + $0x3a0] sm:$0xff]
    %v191 = vld [vmem:[#allocation5 + $0x3a8] sm:$0xff]
    %v192 = vld [vmem:[#allocation5 + $0x3b0] sm:$0xff]
    %v193 = vld [vmem:[#allocation5 + $0x3b8] sm:$0xff]
    %v194 = vld [vmem:[#allocation5 + $0x3c0] sm:$0xff]
    %v195 = vld [vmem:[#allocation5 + $0x3c8] sm:$0xff]
    %v196 = vld [vmem:[#allocation5 + $0x3d0] sm:$0xff]
    %v197 = vld [vmem:[#allocation5 + $0x3d8] sm:$0xff]
    %v198 = vld [vmem:[#allocation5 + $0x3e0] sm:$0xff]
    %v199 = vld [vmem:[#allocation5 + $0x3e8] sm:$0xff]
    %v200 = vld [vmem:[#allocation5 + $0x3f0] sm:$0xff]
    %v201 = vld [vmem:[#allocation5 + $0x3f8] sm:$0xff]
    %v202 = vld [vmem:[%s2] sm:$0xff]
    %v204 = vlaneseq
    %v205 = vshrl.u32 %v204, 7
    %v206 = vsub.s32 0, %v205
    %v207 = vrot.slane %v202, %v206
    %v208 = vlaneseq
    %v209 = vshrl.u32 %v208, 7
    %v210 = vsub.s32 1, %v209
    %v211 = vrot.slane %v202, %v210
    %v212 = vlaneseq
    %v213 = vshrl.u32 %v212, 7
    %v214 = vsub.s32 2, %v213
    %v215 = vrot.slane %v202, %v214
    %v216 = vlaneseq
    %v217 = vshrl.u32 %v216, 7
    %v218 = vsub.s32 3, %v217
    %v219 = vrot.slane %v202, %v218
    %v220 = vlaneseq
    %v221 = vshrl.u32 %v220, 7
    %v222 = vsub.s32 4, %v221
    %v223 = vrot.slane %v202, %v222
    %v224 = vlaneseq
    %v225 = vshrl.u32 %v224, 7
    %v226 = vsub.s32 5, %v225
    %v227 = vrot.slane %v202, %v226
    %v228 = vlaneseq
    %v229 = vshrl.u32 %v228, 7
    %v230 = vsub.s32 6, %v229
    %v231 = vrot.slane %v202, %v230
    %v232 = vlaneseq
    %v233 = vshrl.u32 %v232, 7
    %v234 = vsub.s32 7, %v233
    %v235 = vrot.slane %v202, %v234
    %v372 = vunpack.c.l.b16 %v74
    %v373 = vunpack.c.h.b16 %v74
    %v374 = vunpack.c.l.b16 %v75
    %v375 = vunpack.c.h.b16 %v75
    %v376 = vunpack.c.l.b16 %v76
    %v377 = vunpack.c.h.b16 %v76
    %v378 = vunpack.c.l.b16 %v77
    %v379 = vunpack.c.h.b16 %v77
    %v380 = vunpack.c.l.b16 %v78
    %v381 = vunpack.c.h.b16 %v78
    %v382 = vunpack.c.l.b16 %v79
    %v383 = vunpack.c.h.b16 %v79
    %v384 = vunpack.c.l.b16 %v80
    %v385 = vunpack.c.h.b16 %v80
    %v386 = vunpack.c.l.b16 %v81
    %v387 = vunpack.c.h.b16 %v81
    %v388 = vunpack.c.l.b16 %v82
    %v389 = vunpack.c.h.b16 %v82
    %v390 = vunpack.c.l.b16 %v83
    %v391 = vunpack.c.h.b16 %v83
    %v392 = vunpack.c.l.b16 %v84
    %v393 = vunpack.c.h.b16 %v84
    %v394 = vunpack.c.l.b16 %v85
    %v395 = vunpack.c.h.b16 %v85
    %v396 = vunpack.c.l.b16 %v86
    %v397 = vunpack.c.h.b16 %v86
    %v398 = vunpack.c.l.b16 %v87
    %v399 = vunpack.c.h.b16 %v87
    %v400 = vunpack.c.l.b16 %v88
    %v401 = vunpack.c.h.b16 %v88
    %v402 = vunpack.c.l.b16 %v89
    %v403 = vunpack.c.h.b16 %v89
    %v404 = vunpack.c.l.b16 %v90
    %v405 = vunpack.c.h.b16 %v90
    %v406 = vunpack.c.l.b16 %v91
    %v407 = vunpack.c.h.b16 %v91
    %v408 = vunpack.c.l.b16 %v92
    %v409 = vunpack.c.h.b16 %v92
    %v410 = vunpack.c.l.b16 %v93
    %v411 = vunpack.c.h.b16 %v93
    %v412 = vunpack.c.l.b16 %v94
    %v413 = vunpack.c.h.b16 %v94
    %v414 = vunpack.c.l.b16 %v95
    %v415 = vunpack.c.h.b16 %v95
    %v416 = vunpack.c.l.b16 %v96
    %v417 = vunpack.c.h.b16 %v96
    %v418 = vunpack.c.l.b16 %v97
    %v419 = vunpack.c.h.b16 %v97
    %v420 = vunpack.c.l.b16 %v98
    %v421 = vunpack.c.h.b16 %v98
    %v422 = vunpack.c.l.b16 %v99
    %v423 = vunpack.c.h.b16 %v99
    %v424 = vunpack.c.l.b16 %v100
    %v425 = vunpack.c.h.b16 %v100
    %v426 = vunpack.c.l.b16 %v101
    %v427 = vunpack.c.h.b16 %v101
    %v428 = vunpack.c.l.b16 %v102
    %v429 = vunpack.c.h.b16 %v102
    %v430 = vunpack.c.l.b16 %v103
    %v431 = vunpack.c.h.b16 %v103
    %v432 = vunpack.c.l.b16 %v104
    %v433 = vunpack.c.h.b16 %v104
    %v434 = vunpack.c.l.b16 %v105
    %v435 = vunpack.c.h.b16 %v105
    %v436 = vunpack.c.l.b16 %v106
    %v437 = vunpack.c.h.b16 %v106
    %v438 = vunpack.c.l.b16 %v107
    %v439 = vunpack.c.h.b16 %v107
    %v440 = vunpack.c.l.b16 %v108
    %v441 = vunpack.c.h.b16 %v108
    %v442 = vunpack.c.l.b16 %v109
    %v443 = vunpack.c.h.b16 %v109
    %v444 = vunpack.c.l.b16 %v110
    %v445 = vunpack.c.h.b16 %v110
    %v446 = vunpack.c.l.b16 %v111
    %v447 = vunpack.c.h.b16 %v111
    %v448 = vunpack.c.l.b16 %v112
    %v449 = vunpack.c.h.b16 %v112
    %v450 = vunpack.c.l.b16 %v113
    %v451 = vunpack.c.h.b16 %v113
    %v452 = vunpack.c.l.b16 %v114
    %v453 = vunpack.c.h.b16 %v114
    %v454 = vunpack.c.l.b16 %v115
    %v455 = vunpack.c.h.b16 %v115
    %v456 = vunpack.c.l.b16 %v116
    %v457 = vunpack.c.h.b16 %v116
    %v458 = vunpack.c.l.b16 %v117
    %v459 = vunpack.c.h.b16 %v117
    %v460 = vunpack.c.l.b16 %v118
    %v461 = vunpack.c.h.b16 %v118
    %v462 = vunpack.c.l.b16 %v119
    %v463 = vunpack.c.h.b16 %v119
    %v464 = vunpack.c.l.b16 %v120
    %v465 = vunpack.c.h.b16 %v120
    %v466 = vunpack.c.l.b16 %v121
    %v467 = vunpack.c.h.b16 %v121
    %v468 = vunpack.c.l.b16 %v122
    %v469 = vunpack.c.h.b16 %v122
    %v470 = vunpack.c.l.b16 %v123
    %v471 = vunpack.c.h.b16 %v123
    %v472 = vunpack.c.l.b16 %v124
    %v473 = vunpack.c.h.b16 %v124
    %v474 = vunpack.c.l.b16 %v125
    %v475 = vunpack.c.h.b16 %v125
    %v476 = vunpack.c.l.b16 %v126
    %v477 = vunpack.c.h.b16 %v126
    %v478 = vunpack.c.l.b16 %v127
    %v479 = vunpack.c.h.b16 %v127
    %v480 = vunpack.c.l.b16 %v128
    %v481 = vunpack.c.h.b16 %v128
    %v482 = vunpack.c.l.b16 %v129
    %v483 = vunpack.c.h.b16 %v129
    %v484 = vunpack.c.l.b16 %v130
    %v485 = vunpack.c.h.b16 %v130
    %v486 = vunpack.c.l.b16 %v131
    %v487 = vunpack.c.h.b16 %v131
    %v488 = vunpack.c.l.b16 %v132
    %v489 = vunpack.c.h.b16 %v132
    %v490 = vunpack.c.l.b16 %v133
    %v491 = vunpack.c.h.b16 %v133
    %v492 = vunpack.c.l.b16 %v134
    %v493 = vunpack.c.h.b16 %v134
    %v494 = vunpack.c.l.b16 %v135
    %v495 = vunpack.c.h.b16 %v135
    %v496 = vunpack.c.l.b16 %v136
    %v497 = vunpack.c.h.b16 %v136
    %v498 = vunpack.c.l.b16 %v137
    %v499 = vunpack.c.h.b16 %v137
    %v500 = vunpack.c.l.b16 %v138
    %v501 = vunpack.c.h.b16 %v138
    %v502 = vunpack.c.l.b16 %v139
    %v503 = vunpack.c.h.b16 %v139
    %v504 = vunpack.c.l.b16 %v140
    %v505 = vunpack.c.h.b16 %v140
    %v506 = vunpack.c.l.b16 %v141
    %v507 = vunpack.c.h.b16 %v141
    %v508 = vunpack.c.l.b16 %v142
    %v509 = vunpack.c.h.b16 %v142
    %v510 = vunpack.c.l.b16 %v143
    %v511 = vunpack.c.h.b16 %v143
    %v512 = vunpack.c.l.b16 %v144
    %v513 = vunpack.c.h.b16 %v144
    %v514 = vunpack.c.l.b16 %v145
    %v515 = vunpack.c.h.b16 %v145
    %v516 = vunpack.c.l.b16 %v146
    %v517 = vunpack.c.h.b16 %v146
    %v518 = vunpack.c.l.b16 %v147
    %v519 = vunpack.c.h.b16 %v147
    %v520 = vunpack.c.l.b16 %v148
    %v521 = vunpack.c.h.b16 %v148
    %v522 = vunpack.c.l.b16 %v149
    %v523 = vunpack.c.h.b16 %v149
    %v524 = vunpack.c.l.b16 %v150
    %v525 = vunpack.c.h.b16 %v150
    %v526 = vunpack.c.l.b16 %v151
    %v527 = vunpack.c.h.b16 %v151
    %v528 = vunpack.c.l.b16 %v152
    %v529 = vunpack.c.h.b16 %v152
    %v530 = vunpack.c.l.b16 %v153
    %v531 = vunpack.c.h.b16 %v153
    %v532 = vunpack.c.l.b16 %v154
    %v533 = vunpack.c.h.b16 %v154
    %v534 = vunpack.c.l.b16 %v155
    %v535 = vunpack.c.h.b16 %v155
    %v536 = vunpack.c.l.b16 %v156
    %v537 = vunpack.c.h.b16 %v156
    %v538 = vunpack.c.l.b16 %v157
    %v539 = vunpack.c.h.b16 %v157
    %v540 = vunpack.c.l.b16 %v158
    %v541 = vunpack.c.h.b16 %v158
    %v542 = vunpack.c.l.b16 %v159
    %v543 = vunpack.c.h.b16 %v159
    %v544 = vunpack.c.l.b16 %v160
    %v545 = vunpack.c.h.b16 %v160
    %v546 = vunpack.c.l.b16 %v161
    %v547 = vunpack.c.h.b16 %v161
    %v548 = vunpack.c.l.b16 %v162
    %v549 = vunpack.c.h.b16 %v162
    %v550 = vunpack.c.l.b16 %v163
    %v551 = vunpack.c.h.b16 %v163
    %v552 = vunpack.c.l.b16 %v164
    %v553 = vunpack.c.h.b16 %v164
    %v554 = vunpack.c.l.b16 %v165
    %v555 = vunpack.c.h.b16 %v165
    %v556 = vunpack.c.l.b16 %v166
    %v557 = vunpack.c.h.b16 %v166
    %v558 = vunpack.c.l.b16 %v167
    %v559 = vunpack.c.h.b16 %v167
    %v560 = vunpack.c.l.b16 %v168
    %v561 = vunpack.c.h.b16 %v168
    %v562 = vunpack.c.l.b16 %v169
    %v563 = vunpack.c.h.b16 %v169
    %v564 = vunpack.c.l.b16 %v170
    %v565 = vunpack.c.h.b16 %v170
    %v566 = vunpack.c.l.b16 %v171
    %v567 = vunpack.c.h.b16 %v171
    %v568 = vunpack.c.l.b16 %v172
    %v569 = vunpack.c.h.b16 %v172
    %v570 = vunpack.c.l.b16 %v173
    %v571 = vunpack.c.h.b16 %v173
    %v572 = vunpack.c.l.b16 %v174
    %v573 = vunpack.c.h.b16 %v174
    %v574 = vunpack.c.l.b16 %v175
    %v575 = vunpack.c.h.b16 %v175
    %v576 = vunpack.c.l.b16 %v176
    %v577 = vunpack.c.h.b16 %v176
    %v578 = vunpack.c.l.b16 %v177
    %v579 = vunpack.c.h.b16 %v177
    %v580 = vunpack.c.l.b16 %v178
    %v581 = vunpack.c.h.b16 %v178
    %v582 = vunpack.c.l.b16 %v179
    %v583 = vunpack.c.h.b16 %v179
    %v584 = vunpack.c.l.b16 %v180
    %v585 = vunpack.c.h.b16 %v180
    %v586 = vunpack.c.l.b16 %v181
    %v587 = vunpack.c.h.b16 %v181
    %v588 = vunpack.c.l.b16 %v182
    %v589 = vunpack.c.h.b16 %v182
    %v590 = vunpack.c.l.b16 %v183
    %v591 = vunpack.c.h.b16 %v183
    %v592 = vunpack.c.l.b16 %v184
    %v593 = vunpack.c.h.b16 %v184
    %v594 = vunpack.c.l.b16 %v185
    %v595 = vunpack.c.h.b16 %v185
    %v596 = vunpack.c.l.b16 %v186
    %v597 = vunpack.c.h.b16 %v186
    %v598 = vunpack.c.l.b16 %v187
    %v599 = vunpack.c.h.b16 %v187
    %v600 = vunpack.c.l.b16 %v188
    %v601 = vunpack.c.h.b16 %v188
    %v602 = vunpack.c.l.b16 %v189
    %v603 = vunpack.c.h.b16 %v189
    %v604 = vunpack.c.l.b16 %v190
    %v605 = vunpack.c.h.b16 %v190
    %v606 = vunpack.c.l.b16 %v191
    %v607 = vunpack.c.h.b16 %v191
    %v608 = vunpack.c.l.b16 %v192
    %v609 = vunpack.c.h.b16 %v192
    %v610 = vunpack.c.l.b16 %v193
    %v611 = vunpack.c.h.b16 %v193
    %v612 = vunpack.c.l.b16 %v194
    %v613 = vunpack.c.h.b16 %v194
    %v614 = vunpack.c.l.b16 %v195
    %v615 = vunpack.c.h.b16 %v195
    %v616 = vunpack.c.l.b16 %v196
    %v617 = vunpack.c.h.b16 %v196
    %v618 = vunpack.c.l.b16 %v197
    %v619 = vunpack.c.h.b16 %v197
    %v620 = vunpack.c.l.b16 %v198
    %v621 = vunpack.c.h.b16 %v198
    %v622 = vunpack.c.l.b16 %v199
    %v623 = vunpack.c.h.b16 %v199
    %v624 = vunpack.c.l.b16 %v200
    %v625 = vunpack.c.h.b16 %v200
    %v626 = vunpack.c.l.b16 %v201
    %v627 = vunpack.c.h.b16 %v201
    %v628 = vpack.c.b16 %v380, %v372
    %v629 = vpack.c.b16 %v381, %v373
    %v630 = vpack.c.b16 %v382, %v374
    %v631 = vpack.c.b16 %v383, %v375
    %v632 = vpack.c.b16 %v384, %v376
    %v633 = vpack.c.b16 %v385, %v377
    %v634 = vpack.c.b16 %v386, %v378
    %v635 = vpack.c.b16 %v387, %v379
    %v636 = vpack.c.b16 %v396, %v388
    %v637 = vpack.c.b16 %v397, %v389
    %v638 = vpack.c.b16 %v398, %v390
    %v639 = vpack.c.b16 %v399, %v391
    %v640 = vpack.c.b16 %v400, %v392
    %v641 = vpack.c.b16 %v401, %v393
    %v642 = vpack.c.b16 %v402, %v394
    %v643 = vpack.c.b16 %v403, %v395
    %v644 = vpack.c.b16 %v412, %v404
    %v645 = vpack.c.b16 %v413, %v405
    %v646 = vpack.c.b16 %v414, %v406
    %v647 = vpack.c.b16 %v415, %v407
    %v648 = vpack.c.b16 %v416, %v408
    %v649 = vpack.c.b16 %v417, %v409
    %v650 = vpack.c.b16 %v418, %v410
    %v651 = vpack.c.b16 %v419, %v411
    %v652 = vpack.c.b16 %v428, %v420
    %v653 = vpack.c.b16 %v429, %v421
    %v654 = vpack.c.b16 %v430, %v422
    %v655 = vpack.c.b16 %v431, %v423
    %v656 = vpack.c.b16 %v432, %v424
    %v657 = vpack.c.b16 %v433, %v425
    %v658 = vpack.c.b16 %v434, %v426
    %v659 = vpack.c.b16 %v435, %v427
    %v660 = vpack.c.b16 %v444, %v436
    %v661 = vpack.c.b16 %v445, %v437
    %v662 = vpack.c.b16 %v446, %v438
    %v663 = vpack.c.b16 %v447, %v439
    %v664 = vpack.c.b16 %v448, %v440
    %v665 = vpack.c.b16 %v449, %v441
    %v666 = vpack.c.b16 %v450, %v442
    %v667 = vpack.c.b16 %v451, %v443
    %v668 = vpack.c.b16 %v460, %v452
    %v669 = vpack.c.b16 %v461, %v453
    %v670 = vpack.c.b16 %v462, %v454
    %v671 = vpack.c.b16 %v463, %v455
    %v672 = vpack.c.b16 %v464, %v456
    %v673 = vpack.c.b16 %v465, %v457
    %v674 = vpack.c.b16 %v466, %v458
    %v675 = vpack.c.b16 %v467, %v459
    %v676 = vpack.c.b16 %v476, %v468
    %v677 = vpack.c.b16 %v477, %v469
    %v678 = vpack.c.b16 %v478, %v470
    %v679 = vpack.c.b16 %v479, %v471
    %v680 = vpack.c.b16 %v480, %v472
    %v681 = vpack.c.b16 %v481, %v473
    %v682 = vpack.c.b16 %v482, %v474
    %v683 = vpack.c.b16 %v483, %v475
    %v684 = vpack.c.b16 %v492, %v484
    %v685 = vpack.c.b16 %v493, %v485
    %v686 = vpack.c.b16 %v494, %v486
    %v687 = vpack.c.b16 %v495, %v487
    %v688 = vpack.c.b16 %v496, %v488
    %v689 = vpack.c.b16 %v497, %v489
    %v690 = vpack.c.b16 %v498, %v490
    %v691 = vpack.c.b16 %v499, %v491
    %v692 = vpack.c.b16 %v508, %v500
    %v693 = vpack.c.b16 %v509, %v501
    %v694 = vpack.c.b16 %v510, %v502
    %v695 = vpack.c.b16 %v511, %v503
    %v696 = vpack.c.b16 %v512, %v504
    %v697 = vpack.c.b16 %v513, %v505
    %v698 = vpack.c.b16 %v514, %v506
    %v699 = vpack.c.b16 %v515, %v507
    %v700 = vpack.c.b16 %v524, %v516
    %v701 = vpack.c.b16 %v525, %v517
    %v702 = vpack.c.b16 %v526, %v518
    %v703 = vpack.c.b16 %v527, %v519
    %v704 = vpack.c.b16 %v528, %v520
    %v705 = vpack.c.b16 %v529, %v521
    %v706 = vpack.c.b16 %v530, %v522
    %v707 = vpack.c.b16 %v531, %v523
    %v708 = vpack.c.b16 %v540, %v532
    %v709 = vpack.c.b16 %v541, %v533
    %v710 = vpack.c.b16 %v542, %v534
    %v711 = vpack.c.b16 %v543, %v535
    %v712 = vpack.c.b16 %v544, %v536
    %v713 = vpack.c.b16 %v545, %v537
    %v714 = vpack.c.b16 %v546, %v538
    %v715 = vpack.c.b16 %v547, %v539
    %v716 = vpack.c.b16 %v556, %v548
    %v717 = vpack.c.b16 %v557, %v549
    %v718 = vpack.c.b16 %v558, %v550
    %v719 = vpack.c.b16 %v559, %v551
    %v720 = vpack.c.b16 %v560, %v552
    %v721 = vpack.c.b16 %v561, %v553
    %v722 = vpack.c.b16 %v562, %v554
    %v723 = vpack.c.b16 %v563, %v555
    %v724 = vpack.c.b16 %v572, %v564
    %v725 = vpack.c.b16 %v573, %v565
    %v726 = vpack.c.b16 %v574, %v566
    %v727 = vpack.c.b16 %v575, %v567
    %v728 = vpack.c.b16 %v576, %v568
    %v729 = vpack.c.b16 %v577, %v569
    %v730 = vpack.c.b16 %v578, %v570
    %v731 = vpack.c.b16 %v579, %v571
    %v732 = vpack.c.b16 %v588, %v580
    %v733 = vpack.c.b16 %v589, %v581
    %v734 = vpack.c.b16 %v590, %v582
    %v735 = vpack.c.b16 %v591, %v583
    %v736 = vpack.c.b16 %v592, %v584
    %v737 = vpack.c.b16 %v593, %v585
    %v738 = vpack.c.b16 %v594, %v586
    %v739 = vpack.c.b16 %v595, %v587
    %v740 = vpack.c.b16 %v604, %v596
    %v741 = vpack.c.b16 %v605, %v597
    %v742 = vpack.c.b16 %v606, %v598
    %v743 = vpack.c.b16 %v607, %v599
    %v744 = vpack.c.b16 %v608, %v600
    %v745 = vpack.c.b16 %v609, %v601
    %v746 = vpack.c.b16 %v610, %v602
    %v747 = vpack.c.b16 %v611, %v603
    %v748 = vpack.c.b16 %v620, %v612
    %v749 = vpack.c.b16 %v621, %v613
    %v750 = vpack.c.b16 %v622, %v614
    %v751 = vpack.c.b16 %v623, %v615
    %v752 = vpack.c.b16 %v624, %v616
    %v753 = vpack.c.b16 %v625, %v617
    %v754 = vpack.c.b16 %v626, %v618
    %v755 = vpack.c.b16 %v627, %v619
    %884 = vmatprep.subr.bf16.mxu0 %v629
    %885 = vmatpush1.bf16.msra.mxu0 %v628
    %886 = vmatprep.subr.bf16.mxu0 %v637
    %887 = vmatpush1.bf16.msra.mxu0 %v636
    %888 = vmatprep.subr.bf16.mxu0 %v645
    %889 = vmatpush1.bf16.msra.mxu0 %v644
    %890 = vmatprep.subr.bf16.mxu0 %v653
    %891 = vmatpush1.bf16.msra.mxu0 %v652
    %892 = vmatprep.subr.bf16.mxu0 %v661
    %893 = vmatpush1.bf16.msra.mxu0 %v660
    %894 = vmatprep.subr.bf16.mxu0 %v669
    %895 = vmatpush1.bf16.msra.mxu0 %v668
    %896 = vmatprep.subr.bf16.mxu0 %v677
    %897 = vmatpush1.bf16.msra.mxu0 %v676
    %898 = vmatprep.subr.bf16.mxu0 %v685
    %899 = vmatpush1.bf16.msra.mxu0 %v684
    %900 = vmatprep.subr.bf16.mxu0 %v693
    %901 = vmatpush1.bf16.msra.mxu0 %v692
    %902 = vmatprep.subr.bf16.mxu0 %v701
    %903 = vmatpush1.bf16.msra.mxu0 %v700
    %904 = vmatprep.subr.bf16.mxu0 %v709
    %905 = vmatpush1.bf16.msra.mxu0 %v708
    %906 = vmatprep.subr.bf16.mxu0 %v717
    %907 = vmatpush1.bf16.msra.mxu0 %v716
    %908 = vmatprep.subr.bf16.mxu0 %v725
    %909 = vmatpush1.bf16.msra.mxu0 %v724
    %910 = vmatprep.subr.bf16.mxu0 %v733
    %911 = vmatpush1.bf16.msra.mxu0 %v732
    %912 = vmatprep.subr.bf16.mxu0 %v741
    %913 = vmatpush1.bf16.msra.mxu0 %v740
    %914 = vmatprep.subr.bf16.mxu0 %v749
    %915 = vmatpush1.bf16.msra.mxu0 %v748
    %916 = vmatprep.mubr.bf16.mxu0 %v71
    %917 = vmatmul.mubr.bf16.gmra.mrb[0].mxu0 %v70
    %v918 = vpop.f32.mrb[0].mxu0
    %v919 = vadd.f32 %v207, %v918
    %v920 = vpop.f32.mrb[0].mxu0
    %v921 = vadd.f32 %v211, %v920
    %v922 = vpop.f32.mrb[0].mxu0
    %v923 = vadd.f32 %v207, %v922
    %v924 = vpop.f32.mrb[0].mxu0
    %v925 = vadd.f32 %v211, %v924
    %926 = vmatprep.mubr.bf16.mxu0 %v73
    %927 = vmatmul.mubr.bf16.gmra.mrb[0].mxu0 %v72
    %v928 = vpop.f32.mrb[0].mxu0
    %v929 = vadd.f32 %v207, %v928
    %v930 = vpop.f32.mrb[0].mxu0
    %v931 = vadd.f32 %v211, %v930
    %v932 = vpop.f32.mrb[0].mxu0
    %v933 = vadd.f32 %v207, %v932
    %v934 = vpop.f32.mrb[0].mxu0
    %v935 = vadd.f32 %v211, %v934
    %936 = vdwg.mxu0
    %937 = vmatprep.subr.bf16.mxu0 %v631
    %938 = vmatpush1.bf16.msra.mxu0 %v630
    %939 = vmatprep.subr.bf16.mxu0 %v639
    %940 = vmatpush1.bf16.msra.mxu0 %v638
    %941 = vmatprep.subr.bf16.mxu0 %v647
    %942 = vmatpush1.bf16.msra.mxu0 %v646
    %943 = vmatprep.subr.bf16.mxu0 %v655
    %944 = vmatpush1.bf16.msra.mxu0 %v654
    %945 = vmatprep.subr.bf16.mxu0 %v663
    %946 = vmatpush1.bf16.msra.mxu0 %v662
    %947 = vmatprep.subr.bf16.mxu0 %v671
    %948 = vmatpush1.bf16.msra.mxu0 %v670
    %949 = vmatprep.subr.bf16.mxu0 %v679
    %950 = vmatpush1.bf16.msra.mxu0 %v678
    %951 = vmatprep.subr.bf16.mxu0 %v687
    %952 = vmatpush1.bf16.msra.mxu0 %v686
    %953 = vmatprep.subr.bf16.mxu0 %v695
    %954 = vmatpush1.bf16.msra.mxu0 %v694
    %955 = vmatprep.subr.bf16.mxu0 %v703
    %956 = vmatpush1.bf16.msra.mxu0 %v702
    %957 = vmatprep.subr.bf16.mxu0 %v711
    %958 = vmatpush1.bf16.msra.mxu0 %v710
    %959 = vmatprep.subr.bf16.mxu0 %v719
    %960 = vmatpush1.bf16.msra.mxu0 %v718
    %961 = vmatprep.subr.bf16.mxu0 %v727
    %962 = vmatpush1.bf16.msra.mxu0 %v726
    %963 = vmatprep.subr.bf16.mxu0 %v735
    %964 = vmatpush1.bf16.msra.mxu0 %v734
    %965 = vmatprep.subr.bf16.mxu0 %v743
    %966 = vmatpush1.bf16.msra.mxu0 %v742
    %967 = vmatprep.subr.bf16.mxu0 %v751
    %968 = vmatpush1.bf16.msra.mxu0 %v750
    %969 = vmatprep.mubr.bf16.mxu0 %v71
    %970 = vmatmul.mubr.bf16.gmra.mrb[0].mxu0 %v70
    %v971 = vpop.f32.mrb[0].mxu0
    %v972 = vadd.f32 %v215, %v971
    %v973 = vpop.f32.mrb[0].mxu0
    %v974 = vadd.f32 %v219, %v973
    %v975 = vpop.f32.mrb[0].mxu0
    %v976 = vadd.f32 %v215, %v975
    %v977 = vpop.f32.mrb[0].mxu0
    %v978 = vadd.f32 %v219, %v977
    %979 = vmatprep.mubr.bf16.mxu0 %v73
    %980 = vmatmul.mubr.bf16.gmra.mrb[0].mxu0 %v72
    %v981 = vpop.f32.mrb[0].mxu0
    %v982 = vadd.f32 %v215, %v981
    %v983 = vpop.f32.mrb[0].mxu0
    %v984 = vadd.f32 %v219, %v983
    %v985 = vpop.f32.mrb[0].mxu0
    %v986 = vadd.f32 %v215, %v985
    %v987 = vpop.f32.mrb[0].mxu0
    %v988 = vadd.f32 %v219, %v987
    %989 = vdwg.mxu0
    %990 = vmatprep.subr.bf16.mxu0 %v633
    %991 = vmatpush1.bf16.msra.mxu0 %v632
    %992 = vmatprep.subr.bf16.mxu0 %v641
    %993 = vmatpush1.bf16.msra.mxu0 %v640
    %994 = vmatprep.subr.bf16.mxu0 %v649
    %995 = vmatpush1.bf16.msra.mxu0 %v648
    %996 = vmatprep.subr.bf16.mxu0 %v657
    %997 = vmatpush1.bf16.msra.mxu0 %v656
    %998 = vmatprep.subr.bf16.mxu0 %v665
    %999 = vmatpush1.bf16.msra.mxu0 %v664
    %1000 = vmatprep.subr.bf16.mxu0 %v673
    %1001 = vmatpush1.bf16.msra.mxu0 %v672
    %1002 = vmatprep.subr.bf16.mxu0 %v681
    %1003 = vmatpush1.bf16.msra.mxu0 %v680
    %1004 = vmatprep.subr.bf16.mxu0 %v689
    %1005 = vmatpush1.bf16.msra.mxu0 %v688
    %1006 = vmatprep.subr.bf16.mxu0 %v697
    %1007 = vmatpush1.bf16.msra.mxu0 %v696
    %1008 = vmatprep.subr.bf16.mxu0 %v705
    %1009 = vmatpush1.bf16.msra.mxu0 %v704
    %1010 = vmatprep.subr.bf16.mxu0 %v713
    %1011 = vmatpush1.bf16.msra.mxu0 %v712
    %1012 = vmatprep.subr.bf16.mxu0 %v721
    %1013 = vmatpush1.bf16.msra.mxu0 %v720
    %1014 = vmatprep.subr.bf16.mxu0 %v729
    %1015 = vmatpush1.bf16.msra.mxu0 %v728
    %1016 = vmatprep.subr.bf16.mxu0 %v737
    %1017 = vmatpush1.bf16.msra.mxu0 %v736
    %1018 = vmatprep.subr.bf16.mxu0 %v745
    %1019 = vmatpush1.bf16.msra.mxu0 %v744
    %1020 = vmatprep.subr.bf16.mxu0 %v753
    %1021 = vmatpush1.bf16.msra.mxu0 %v752
    %1022 = vmatprep.mubr.bf16.mxu0 %v71
    %1023 = vmatmul.mubr.bf16.gmra.mrb[0].mxu0 %v70
    %v1024 = vpop.f32.mrb[0].mxu0
    %v1025 = vadd.f32 %v223, %v1024
    %v1026 = vpop.f32.mrb[0].mxu0
    %v1027 = vadd.f32 %v227, %v1026
    %v1028 = vpop.f32.mrb[0].mxu0
    %v1029 = vadd.f32 %v223, %v1028
    %v1030 = vpop.f32.mrb[0].mxu0
    %v1031 = vadd.f32 %v227, %v1030
    %1032 = vmatprep.mubr.bf16.mxu0 %v73
    %1033 = vmatmul.mubr.bf16.gmra.mrb[0].mxu0 %v72
    %v1034 = vpop.f32.mrb[0].mxu0
    %v1035 = vadd.f32 %v223, %v1034
    %v1036 = vpop.f32.mrb[0].mxu0
    %v1037 = vadd.f32 %v227, %v1036
    %v1038 = vpop.f32.mrb[0].mxu0
    %v1039 = vadd.f32 %v223, %v1038
    %v1040 = vpop.f32.mrb[0].mxu0
    %v1041 = vadd.f32 %v227, %v1040
    %1042 = vdwg.mxu0
    %1043 = vmatprep.subr.bf16.mxu0 %v635
    %1044 = vmatpush1.bf16.msra.mxu0 %v634
    %1045 = vmatprep.subr.bf16.mxu0 %v643
    %1046 = vmatpush1.bf16.msra.mxu0 %v642
    %1047 = vmatprep.subr.bf16.mxu0 %v651
    %1048 = vmatpush1.bf16.msra.mxu0 %v650
    %1049 = vmatprep.subr.bf16.mxu0 %v659
    %1050 = vmatpush1.bf16.msra.mxu0 %v658
    %1051 = vmatprep.subr.bf16.mxu0 %v667
    %1052 = vmatpush1.bf16.msra.mxu0 %v666
    %1053 = vmatprep.subr.bf16.mxu0 %v675
    %1054 = vmatpush1.bf16.msra.mxu0 %v674
    %1055 = vmatprep.subr.bf16.mxu0 %v683
    %1056 = vmatpush1.bf16.msra.mxu0 %v682
    %1057 = vmatprep.subr.bf16.mxu0 %v691
    %1058 = vmatpush1.bf16.msra.mxu0 %v690
    %1059 = vmatprep.subr.bf16.mxu0 %v699
    %1060 = vmatpush1.bf16.msra.mxu0 %v698
    %1061 = vmatprep.subr.bf16.mxu0 %v707
    %1062 = vmatpush1.bf16.msra.mxu0 %v706
    %1063 = vmatprep.subr.bf16.mxu0 %v715
    %1064 = vmatpush1.bf16.msra.mxu0 %v714
    %1065 = vmatprep.subr.bf16.mxu0 %v723
    %1066 = vmatpush1.bf16.msra.mxu0 %v722
    %1067 = vmatprep.subr.bf16.mxu0 %v731
    %1068 = vmatpush1.bf16.msra.mxu0 %v730
    %1069 = vmatprep.subr.bf16.mxu0 %v739
    %1070 = vmatpush1.bf16.msra.mxu0 %v738
    %1071 = vmatprep.subr.bf16.mxu0 %v747
    %1072 = vmatpush1.bf16.msra.mxu0 %v746
    %1073 = vmatprep.subr.bf16.mxu0 %v755
    %1074 = vmatpush1.bf16.msra.mxu0 %v754
    %1075 = vmatprep.mubr.bf16.mxu0 %v71
    %1076 = vmatmul.mubr.bf16.gmra.mrb[0].mxu0 %v70
    %v1077 = vpop.f32.mrb[0].mxu0
    %v1078 = vadd.f32 %v231, %v1077
    %v1079 = vpop.f32.mrb[0].mxu0
    %v1080 = vadd.f32 %v235, %v1079
    %v1081 = vpop.f32.mrb[0].mxu0
    %v1082 = vadd.f32 %v231, %v1081
    %v1083 = vpop.f32.mrb[0].mxu0
    %v1084 = vadd.f32 %v235, %v1083
    %1085 = vmatprep.mubr.bf16.mxu0 %v73
    %1086 = vmatmul.mubr.bf16.gmra.mrb[0].mxu0 %v72
    %v1087 = vpop.f32.mrb[0].mxu0
    %v1088 = vadd.f32 %v231, %v1087
    %v1089 = vpop.f32.mrb[0].mxu0
    %v1090 = vadd.f32 %v235, %v1089
    %v1091 = vpop.f32.mrb[0].mxu0
    %v1092 = vadd.f32 %v231, %v1091
    %v1093 = vpop.f32.mrb[0].mxu0
    %v1094 = vadd.f32 %v235, %v1093
    %1095 = vdwg.mxu0
    %v1096 = vmax.f32 %v919, 0.0
    %v1097 = vmax.f32 %v921, 0.0
    %v1098 = vmax.f32 %v972, 0.0
    %v1099 = vmax.f32 %v974, 0.0
    %v1100 = vmax.f32 %v1025, 0.0
    %v1101 = vmax.f32 %v1027, 0.0
    %v1102 = vmax.f32 %v1078, 0.0
    %v1103 = vmax.f32 %v1080, 0.0
    %v1104 = vmax.f32 %v923, 0.0
    %v1105 = vmax.f32 %v925, 0.0
    %v1106 = vmax.f32 %v976, 0.0
    %v1107 = vmax.f32 %v978, 0.0
    %v1108 = vmax.f32 %v1029, 0.0
    %v1109 = vmax.f32 %v1031, 0.0
    %v1110 = vmax.f32 %v1082, 0.0
    %v1111 = vmax.f32 %v1084, 0.0
    %v1112 = vmax.f32 %v929, 0.0
    %v1113 = vmax.f32 %v931, 0.0
    %v1114 = vmax.f32 %v982, 0.0
    %v1115 = vmax.f32 %v984, 0.0
    %v1116 = vmax.f32 %v1035, 0.0
    %v1117 = vmax.f32 %v1037, 0.0
    %v1118 = vmax.f32 %v1088, 0.0
    %v1119 = vmax.f32 %v1090, 0.0
    %v1120 = vmax.f32 %v933, 0.0
    %v1121 = vmax.f32 %v935, 0.0
    %v1122 = vmax.f32 %v986, 0.0
    %v1123 = vmax.f32 %v988, 0.0
    %v1124 = vmax.f32 %v1039, 0.0
    %v1125 = vmax.f32 %v1041, 0.0
    %v1126 = vmax.f32 %v1092, 0.0
    %v1127 = vmax.f32 %v1094, 0.0
    %v1128 = vpack.c.bf16 %v1104, %v1096
    %v1129 = vpack.c.bf16 %v1105, %v1097
    %v1130 = vpack.c.bf16 %v1106, %v1098
    %v1131 = vpack.c.bf16 %v1107, %v1099
    %v1132 = vpack.c.bf16 %v1108, %v1100
    %v1133 = vpack.c.bf16 %v1109, %v1101
    %v1134 = vpack.c.bf16 %v1110, %v1102
    %v1135 = vpack.c.bf16 %v1111, %v1103
    %v1136 = vpack.c.bf16 %v1120, %v1112
    %v1137 = vpack.c.bf16 %v1121, %v1113
    %v1138 = vpack.c.bf16 %v1122, %v1114
    %v1139 = vpack.c.bf16 %v1123, %v1115
    %v1140 = vpack.c.bf16 %v1124, %v1116
    %v1141 = vpack.c.bf16 %v1125, %v1117
    %v1142 = vpack.c.bf16 %v1126, %v1118
    %v1143 = vpack.c.bf16 %v1127, %v1119
    %v1144 = vld [vmem:[#allocation7] sm:$0xff]
    %v1145 = vld [vmem:[#allocation7 + $0x8] sm:$0xff]
    %v1146 = vld [vmem:[#allocation7 + $0x10] sm:$0xff]
    %v1147 = vld [vmem:[#allocation7 + $0x18] sm:$0xff]
    %v1148 = vld [vmem:[#allocation7 + $0x20] sm:$0xff]
    %v1149 = vld [vmem:[#allocation7 + $0x28] sm:$0xff]
    %v1150 = vld [vmem:[#allocation7 + $0x30] sm:$0xff]
    %v1151 = vld [vmem:[#allocation7 + $0x38] sm:$0xff]
    %v1152 = vld [vmem:[#allocation7 + $0x40] sm:$0xff]
    %v1153 = vld [vmem:[#allocation7 + $0x48] sm:$0xff]
    %v1154 = vld [vmem:[#allocation7 + $0x50] sm:$0xff]
    %v1155 = vld [vmem:[#allocation7 + $0x58] sm:$0xff]
    %v1156 = vld [vmem:[#allocation7 + $0x60] sm:$0xff]
    %v1157 = vld [vmem:[#allocation7 + $0x68] sm:$0xff]
    %v1158 = vld [vmem:[#allocation7 + $0x70] sm:$0xff]
    %v1159 = vld [vmem:[#allocation7 + $0x78] sm:$0xff]
    %v1160 = vld [vmem:[#allocation7 + $0x80] sm:$0xff]
    %v1161 = vld [vmem:[#allocation7 + $0x88] sm:$0xff]
    %v1162 = vld [vmem:[#allocation7 + $0x90] sm:$0xff]
    %v1163 = vld [vmem:[#allocation7 + $0x98] sm:$0xff]
    %v1164 = vld [vmem:[#allocation7 + $0xa0] sm:$0xff]
    %v1165 = vld [vmem:[#allocation7 + $0xa8] sm:$0xff]
    %v1166 = vld [vmem:[#allocation7 + $0xb0] sm:$0xff]
    %v1167 = vld [vmem:[#allocation7 + $0xb8] sm:$0xff]
    %v1168 = vld [vmem:[#allocation7 + $0xc0] sm:$0xff]
    %v1169 = vld [vmem:[#allocation7 + $0xc8] sm:$0xff]
    %v1170 = vld [vmem:[#allocation7 + $0xd0] sm:$0xff]
    %v1171 = vld [vmem:[#allocation7 + $0xd8] sm:$0xff]
    %v1172 = vld [vmem:[#allocation7 + $0xe0] sm:$0xff]
    %v1173 = vld [vmem:[#allocation7 + $0xe8] sm:$0xff]
    %v1174 = vld [vmem:[#allocation7 + $0xf0] sm:$0xff]
    %v1175 = vld [vmem:[#allocation7 + $0xf8] sm:$0xff]
    %v1176 = vld [vmem:[#allocation7 + $0x100] sm:$0xff]
    %v1177 = vld [vmem:[#allocation7 + $0x108] sm:$0xff]
    %v1178 = vld [vmem:[#allocation7 + $0x110] sm:$0xff]
    %v1179 = vld [vmem:[#allocation7 + $0x118] sm:$0xff]
    %v1180 = vld [vmem:[#allocation7 + $0x120] sm:$0xff]
    %v1181 = vld [vmem:[#allocation7 + $0x128] sm:$0xff]
    %v1182 = vld [vmem:[#allocation7 + $0x130] sm:$0xff]
    %v1183 = vld [vmem:[#allocation7 + $0x138] sm:$0xff]
    %v1184 = vld [vmem:[#allocation7 + $0x140] sm:$0xff]
    %v1185 = vld [vmem:[#allocation7 + $0x148] sm:$0xff]
    %v1186 = vld [vmem:[#allocation7 + $0x150] sm:$0xff]
    %v1187 = vld [vmem:[#allocation7 + $0x158] sm:$0xff]
    %v1188 = vld [vmem:[#allocation7 + $0x160] sm:$0xff]
    %v1189 = vld [vmem:[#allocation7 + $0x168] sm:$0xff]
    %v1190 = vld [vmem:[#allocation7 + $0x170] sm:$0xff]
    %v1191 = vld [vmem:[#allocation7 + $0x178] sm:$0xff]
    %v1192 = vld [vmem:[#allocation7 + $0x180] sm:$0xff]
    %v1193 = vld [vmem:[#allocation7 + $0x188] sm:$0xff]
    %v1194 = vld [vmem:[#allocation7 + $0x190] sm:$0xff]
    %v1195 = vld [vmem:[#allocation7 + $0x198] sm:$0xff]
    %v1196 = vld [vmem:[#allocation7 + $0x1a0] sm:$0xff]
    %v1197 = vld [vmem:[#allocation7 + $0x1a8] sm:$0xff]
    %v1198 = vld [vmem:[#allocation7 + $0x1b0] sm:$0xff]
    %v1199 = vld [vmem:[#allocation7 + $0x1b8] sm:$0xff]
    %v1200 = vld [vmem:[#allocation7 + $0x1c0] sm:$0xff]
    %v1201 = vld [vmem:[#allocation7 + $0x1c8] sm:$0xff]
    %v1202 = vld [vmem:[#allocation7 + $0x1d0] sm:$0xff]
    %v1203 = vld [vmem:[#allocation7 + $0x1d8] sm:$0xff]
    %v1204 = vld [vmem:[#allocation7 + $0x1e0] sm:$0xff]
    %v1205 = vld [vmem:[#allocation7 + $0x1e8] sm:$0xff]
    %v1206 = vld [vmem:[#allocation7 + $0x1f0] sm:$0xff]
    %v1207 = vld [vmem:[#allocation7 + $0x1f8] sm:$0xff]
    %v1208 = vld [vmem:[#allocation7 + $0x200] sm:$0xff]
    %v1209 = vld [vmem:[#allocation7 + $0x208] sm:$0xff]
    %v1210 = vld [vmem:[#allocation7 + $0x210] sm:$0xff]
    %v1211 = vld [vmem:[#allocation7 + $0x218] sm:$0xff]
    %v1212 = vld [vmem:[#allocation7 + $0x220] sm:$0xff]
    %v1213 = vld [vmem:[#allocation7 + $0x228] sm:$0xff]
    %v1214 = vld [vmem:[#allocation7 + $0x230] sm:$0xff]
    %v1215 = vld [vmem:[#allocation7 + $0x238] sm:$0xff]
    %v1216 = vld [vmem:[#allocation7 + $0x240] sm:$0xff]
    %v1217 = vld [vmem:[#allocation7 + $0x248] sm:$0xff]
    %v1218 = vld [vmem:[#allocation7 + $0x250] sm:$0xff]
    %v1219 = vld [vmem:[#allocation7 + $0x258] sm:$0xff]
    %v1220 = vld [vmem:[#allocation7 + $0x260] sm:$0xff]
    %v1221 = vld [vmem:[#allocation7 + $0x268] sm:$0xff]
    %v1222 = vld [vmem:[#allocation7 + $0x270] sm:$0xff]
    %v1223 = vld [vmem:[#allocation7 + $0x278] sm:$0xff]
    %v1224 = vld [vmem:[#allocation7 + $0x280] sm:$0xff]
    %v1225 = vld [vmem:[#allocation7 + $0x288] sm:$0xff]
    %v1226 = vld [vmem:[#allocation7 + $0x290] sm:$0xff]
    %v1227 = vld [vmem:[#allocation7 + $0x298] sm:$0xff]
    %v1228 = vld [vmem:[#allocation7 + $0x2a0] sm:$0xff]
    %v1229 = vld [vmem:[#allocation7 + $0x2a8] sm:$0xff]
    %v1230 = vld [vmem:[#allocation7 + $0x2b0] sm:$0xff]
    %v1231 = vld [vmem:[#allocation7 + $0x2b8] sm:$0xff]
    %v1232 = vld [vmem:[#allocation7 + $0x2c0] sm:$0xff]
    %v1233 = vld [vmem:[#allocation7 + $0x2c8] sm:$0xff]
    %v1234 = vld [vmem:[#allocation7 + $0x2d0] sm:$0xff]
    %v1235 = vld [vmem:[#allocation7 + $0x2d8] sm:$0xff]
    %v1236 = vld [vmem:[#allocation7 + $0x2e0] sm:$0xff]
    %v1237 = vld [vmem:[#allocation7 + $0x2e8] sm:$0xff]
    %v1238 = vld [vmem:[#allocation7 + $0x2f0] sm:$0xff]
    %v1239 = vld [vmem:[#allocation7 + $0x2f8] sm:$0xff]
    %v1240 = vld [vmem:[#allocation7 + $0x300] sm:$0xff]
    %v1241 = vld [vmem:[#allocation7 + $0x308] sm:$0xff]
    %v1242 = vld [vmem:[#allocation7 + $0x310] sm:$0xff]
    %v1243 = vld [vmem:[#allocation7 + $0x318] sm:$0xff]
    %v1244 = vld [vmem:[#allocation7 + $0x320] sm:$0xff]
    %v1245 = vld [vmem:[#allocation7 + $0x328] sm:$0xff]
    %v1246 = vld [vmem:[#allocation7 + $0x330] sm:$0xff]
    %v1247 = vld [vmem:[#allocation7 + $0x338] sm:$0xff]
    %v1248 = vld [vmem:[#allocation7 + $0x340] sm:$0xff]
    %v1249 = vld [vmem:[#allocation7 + $0x348] sm:$0xff]
    %v1250 = vld [vmem:[#allocation7 + $0x350] sm:$0xff]
    %v1251 = vld [vmem:[#allocation7 + $0x358] sm:$0xff]
    %v1252 = vld [vmem:[#allocation7 + $0x360] sm:$0xff]
    %v1253 = vld [vmem:[#allocation7 + $0x368] sm:$0xff]
    %v1254 = vld [vmem:[#allocation7 + $0x370] sm:$0xff]
    %v1255 = vld [vmem:[#allocation7 + $0x378] sm:$0xff]
    %v1256 = vld [vmem:[#allocation7 + $0x380] sm:$0xff]
    %v1257 = vld [vmem:[#allocation7 + $0x388] sm:$0xff]
    %v1258 = vld [vmem:[#allocation7 + $0x390] sm:$0xff]
    %v1259 = vld [vmem:[#allocation7 + $0x398] sm:$0xff]
    %v1260 = vld [vmem:[#allocation7 + $0x3a0] sm:$0xff]
    %v1261 = vld [vmem:[#allocation7 + $0x3a8] sm:$0xff]
    %v1262 = vld [vmem:[#allocation7 + $0x3b0] sm:$0xff]
    %v1263 = vld [vmem:[#allocation7 + $0x3b8] sm:$0xff]
    %v1264 = vld [vmem:[#allocation7 + $0x3c0] sm:$0xff]
    %v1265 = vld [vmem:[#allocation7 + $0x3c8] sm:$0xff]
    %v1266 = vld [vmem:[#allocation7 + $0x3d0] sm:$0xff]
    %v1267 = vld [vmem:[#allocation7 + $0x3d8] sm:$0xff]
    %v1268 = vld [vmem:[#allocation7 + $0x3e0] sm:$0xff]
    %v1269 = vld [vmem:[#allocation7 + $0x3e8] sm:$0xff]
    %v1270 = vld [vmem:[#allocation7 + $0x3f0] sm:$0xff]
    %v1271 = vld [vmem:[#allocation7 + $0x3f8] sm:$0xff]
    %v1272 = vld [vmem:[%s4] sm:$0x3]
    %v1274 = vlaneseq
    %v1275 = vshrl.u32 %v1274, 7
    %v1276 = vsub.s32 0, %v1275
    %v1277 = vrot.slane %v1272, %v1276
    %v1278 = vlaneseq
    %v1279 = vshrl.u32 %v1278, 7
    %v1280 = vsub.s32 1, %v1279
    %v1281 = vrot.slane %v1272, %v1280
    %v1412 = vunpack.c.l.b16 %v1144
    %v1413 = vunpack.c.h.b16 %v1144
    %v1414 = vunpack.c.l.b16 %v1145
    %v1415 = vunpack.c.h.b16 %v1145
    %v1416 = vunpack.c.l.b16 %v1146
    %v1417 = vunpack.c.h.b16 %v1146
    %v1418 = vunpack.c.l.b16 %v1147
    %v1419 = vunpack.c.h.b16 %v1147
    %v1420 = vunpack.c.l.b16 %v1148
    %v1421 = vunpack.c.h.b16 %v1148
    %v1422 = vunpack.c.l.b16 %v1149
    %v1423 = vunpack.c.h.b16 %v1149
    %v1424 = vunpack.c.l.b16 %v1150
    %v1425 = vunpack.c.h.b16 %v1150
    %v1426 = vunpack.c.l.b16 %v1151
    %v1427 = vunpack.c.h.b16 %v1151
    %v1428 = vunpack.c.l.b16 %v1152
    %v1429 = vunpack.c.h.b16 %v1152
    %v1430 = vunpack.c.l.b16 %v1153
    %v1431 = vunpack.c.h.b16 %v1153
    %v1432 = vunpack.c.l.b16 %v1154
    %v1433 = vunpack.c.h.b16 %v1154
    %v1434 = vunpack.c.l.b16 %v1155
    %v1435 = vunpack.c.h.b16 %v1155
    %v1436 = vunpack.c.l.b16 %v1156
    %v1437 = vunpack.c.h.b16 %v1156
    %v1438 = vunpack.c.l.b16 %v1157
    %v1439 = vunpack.c.h.b16 %v1157
    %v1440 = vunpack.c.l.b16 %v1158
    %v1441 = vunpack.c.h.b16 %v1158
    %v1442 = vunpack.c.l.b16 %v1159
    %v1443 = vunpack.c.h.b16 %v1159
    %v1444 = vunpack.c.l.b16 %v1160
    %v1445 = vunpack.c.h.b16 %v1160
    %v1446 = vunpack.c.l.b16 %v1161
    %v1447 = vunpack.c.h.b16 %v1161
    %v1448 = vunpack.c.l.b16 %v1162
    %v1449 = vunpack.c.h.b16 %v1162
    %v1450 = vunpack.c.l.b16 %v1163
    %v1451 = vunpack.c.h.b16 %v1163
    %v1452 = vunpack.c.l.b16 %v1164
    %v1453 = vunpack.c.h.b16 %v1164
    %v1454 = vunpack.c.l.b16 %v1165
    %v1455 = vunpack.c.h.b16 %v1165
    %v1456 = vunpack.c.l.b16 %v1166
    %v1457 = vunpack.c.h.b16 %v1166
    %v1458 = vunpack.c.l.b16 %v1167
    %v1459 = vunpack.c.h.b16 %v1167
    %v1460 = vunpack.c.l.b16 %v1168
    %v1461 = vunpack.c.h.b16 %v1168
    %v1462 = vunpack.c.l.b16 %v1169
    %v1463 = vunpack.c.h.b16 %v1169
    %v1464 = vunpack.c.l.b16 %v1170
    %v1465 = vunpack.c.h.b16 %v1170
    %v1466 = vunpack.c.l.b16 %v1171
    %v1467 = vunpack.c.h.b16 %v1171
    %v1468 = vunpack.c.l.b16 %v1172
    %v1469 = vunpack.c.h.b16 %v1172
    %v1470 = vunpack.c.l.b16 %v1173
    %v1471 = vunpack.c.h.b16 %v1173
    %v1472 = vunpack.c.l.b16 %v1174
    %v1473 = vunpack.c.h.b16 %v1174
    %v1474 = vunpack.c.l.b16 %v1175
    %v1475 = vunpack.c.h.b16 %v1175
    %v1476 = vunpack.c.l.b16 %v1176
    %v1477 = vunpack.c.h.b16 %v1176
    %v1478 = vunpack.c.l.b16 %v1177
    %v1479 = vunpack.c.h.b16 %v1177
    %v1480 = vunpack.c.l.b16 %v1178
    %v1481 = vunpack.c.h.b16 %v1178
    %v1482 = vunpack.c.l.b16 %v1179
    %v1483 = vunpack.c.h.b16 %v1179
    %v1484 = vunpack.c.l.b16 %v1180
    %v1485 = vunpack.c.h.b16 %v1180
    %v1486 = vunpack.c.l.b16 %v1181
    %v1487 = vunpack.c.h.b16 %v1181
    %v1488 = vunpack.c.l.b16 %v1182
    %v1489 = vunpack.c.h.b16 %v1182
    %v1490 = vunpack.c.l.b16 %v1183
    %v1491 = vunpack.c.h.b16 %v1183
    %v1492 = vunpack.c.l.b16 %v1184
    %v1493 = vunpack.c.h.b16 %v1184
    %v1494 = vunpack.c.l.b16 %v1185
    %v1495 = vunpack.c.h.b16 %v1185
    %v1496 = vunpack.c.l.b16 %v1186
    %v1497 = vunpack.c.h.b16 %v1186
    %v1498 = vunpack.c.l.b16 %v1187
    %v1499 = vunpack.c.h.b16 %v1187
    %v1500 = vunpack.c.l.b16 %v1188
    %v1501 = vunpack.c.h.b16 %v1188
    %v1502 = vunpack.c.l.b16 %v1189
    %v1503 = vunpack.c.h.b16 %v1189
    %v1504 = vunpack.c.l.b16 %v1190
    %v1505 = vunpack.c.h.b16 %v1190
    %v1506 = vunpack.c.l.b16 %v1191
    %v1507 = vunpack.c.h.b16 %v1191
    %v1508 = vunpack.c.l.b16 %v1192
    %v1509 = vunpack.c.h.b16 %v1192
    %v1510 = vunpack.c.l.b16 %v1193
    %v1511 = vunpack.c.h.b16 %v1193
    %v1512 = vunpack.c.l.b16 %v1194
    %v1513 = vunpack.c.h.b16 %v1194
    %v1514 = vunpack.c.l.b16 %v1195
    %v1515 = vunpack.c.h.b16 %v1195
    %v1516 = vunpack.c.l.b16 %v1196
    %v1517 = vunpack.c.h.b16 %v1196
    %v1518 = vunpack.c.l.b16 %v1197
    %v1519 = vunpack.c.h.b16 %v1197
    %v1520 = vunpack.c.l.b16 %v1198
    %v1521 = vunpack.c.h.b16 %v1198
    %v1522 = vunpack.c.l.b16 %v1199
    %v1523 = vunpack.c.h.b16 %v1199
    %v1524 = vunpack.c.l.b16 %v1200
    %v1525 = vunpack.c.h.b16 %v1200
    %v1526 = vunpack.c.l.b16 %v1201
    %v1527 = vunpack.c.h.b16 %v1201
    %v1528 = vunpack.c.l.b16 %v1202
    %v1529 = vunpack.c.h.b16 %v1202
    %v1530 = vunpack.c.l.b16 %v1203
    %v1531 = vunpack.c.h.b16 %v1203
    %v1532 = vunpack.c.l.b16 %v1204
    %v1533 = vunpack.c.h.b16 %v1204
    %v1534 = vunpack.c.l.b16 %v1205
    %v1535 = vunpack.c.h.b16 %v1205
    %v1536 = vunpack.c.l.b16 %v1206
    %v1537 = vunpack.c.h.b16 %v1206
    %v1538 = vunpack.c.l.b16 %v1207
    %v1539 = vunpack.c.h.b16 %v1207
    %v1540 = vunpack.c.l.b16 %v1208
    %v1541 = vunpack.c.h.b16 %v1208
    %v1542 = vunpack.c.l.b16 %v1209
    %v1543 = vunpack.c.h.b16 %v1209
    %v1544 = vunpack.c.l.b16 %v1210
    %v1545 = vunpack.c.h.b16 %v1210
    %v1546 = vunpack.c.l.b16 %v1211
    %v1547 = vunpack.c.h.b16 %v1211
    %v1548 = vunpack.c.l.b16 %v1212
    %v1549 = vunpack.c.h.b16 %v1212
    %v1550 = vunpack.c.l.b16 %v1213
    %v1551 = vunpack.c.h.b16 %v1213
    %v1552 = vunpack.c.l.b16 %v1214
    %v1553 = vunpack.c.h.b16 %v1214
    %v1554 = vunpack.c.l.b16 %v1215
    %v1555 = vunpack.c.h.b16 %v1215
    %v1556 = vunpack.c.l.b16 %v1216
    %v1557 = vunpack.c.h.b16 %v1216
    %v1558 = vunpack.c.l.b16 %v1217
    %v1559 = vunpack.c.h.b16 %v1217
    %v1560 = vunpack.c.l.b16 %v1218
    %v1561 = vunpack.c.h.b16 %v1218
    %v1562 = vunpack.c.l.b16 %v1219
    %v1563 = vunpack.c.h.b16 %v1219
    %v1564 = vunpack.c.l.b16 %v1220
    %v1565 = vunpack.c.h.b16 %v1220
    %v1566 = vunpack.c.l.b16 %v1221
    %v1567 = vunpack.c.h.b16 %v1221
    %v1568 = vunpack.c.l.b16 %v1222
    %v1569 = vunpack.c.h.b16 %v1222
    %v1570 = vunpack.c.l.b16 %v1223
    %v1571 = vunpack.c.h.b16 %v1223
    %v1572 = vunpack.c.l.b16 %v1224
    %v1573 = vunpack.c.h.b16 %v1224
    %v1574 = vunpack.c.l.b16 %v1225
    %v1575 = vunpack.c.h.b16 %v1225
    %v1576 = vunpack.c.l.b16 %v1226
    %v1577 = vunpack.c.h.b16 %v1226
    %v1578 = vunpack.c.l.b16 %v1227
    %v1579 = vunpack.c.h.b16 %v1227
    %v1580 = vunpack.c.l.b16 %v1228
    %v1581 = vunpack.c.h.b16 %v1228
    %v1582 = vunpack.c.l.b16 %v1229
    %v1583 = vunpack.c.h.b16 %v1229
    %v1584 = vunpack.c.l.b16 %v1230
    %v1585 = vunpack.c.h.b16 %v1230
    %v1586 = vunpack.c.l.b16 %v1231
    %v1587 = vunpack.c.h.b16 %v1231
    %v1588 = vunpack.c.l.b16 %v1232
    %v1589 = vunpack.c.h.b16 %v1232
    %v1590 = vunpack.c.l.b16 %v1233
    %v1591 = vunpack.c.h.b16 %v1233
    %v1592 = vunpack.c.l.b16 %v1234
    %v1593 = vunpack.c.h.b16 %v1234
    %v1594 = vunpack.c.l.b16 %v1235
    %v1595 = vunpack.c.h.b16 %v1235
    %v1596 = vunpack.c.l.b16 %v1236
    %v1597 = vunpack.c.h.b16 %v1236
    %v1598 = vunpack.c.l.b16 %v1237
    %v1599 = vunpack.c.h.b16 %v1237
    %v1600 = vunpack.c.l.b16 %v1238
    %v1601 = vunpack.c.h.b16 %v1238
    %v1602 = vunpack.c.l.b16 %v1239
    %v1603 = vunpack.c.h.b16 %v1239
    %v1604 = vunpack.c.l.b16 %v1240
    %v1605 = vunpack.c.h.b16 %v1240
    %v1606 = vunpack.c.l.b16 %v1241
    %v1607 = vunpack.c.h.b16 %v1241
    %v1608 = vunpack.c.l.b16 %v1242
    %v1609 = vunpack.c.h.b16 %v1242
    %v1610 = vunpack.c.l.b16 %v1243
    %v1611 = vunpack.c.h.b16 %v1243
    %v1612 = vunpack.c.l.b16 %v1244
    %v1613 = vunpack.c.h.b16 %v1244
    %v1614 = vunpack.c.l.b16 %v1245
    %v1615 = vunpack.c.h.b16 %v1245
    %v1616 = vunpack.c.l.b16 %v1246
    %v1617 = vunpack.c.h.b16 %v1246
    %v1618 = vunpack.c.l.b16 %v1247
    %v1619 = vunpack.c.h.b16 %v1247
    %v1620 = vunpack.c.l.b16 %v1248
    %v1621 = vunpack.c.h.b16 %v1248
    %v1622 = vunpack.c.l.b16 %v1249
    %v1623 = vunpack.c.h.b16 %v1249
    %v1624 = vunpack.c.l.b16 %v1250
    %v1625 = vunpack.c.h.b16 %v1250
    %v1626 = vunpack.c.l.b16 %v1251
    %v1627 = vunpack.c.h.b16 %v1251
    %v1628 = vunpack.c.l.b16 %v1252
    %v1629 = vunpack.c.h.b16 %v1252
    %v1630 = vunpack.c.l.b16 %v1253
    %v1631 = vunpack.c.h.b16 %v1253
    %v1632 = vunpack.c.l.b16 %v1254
    %v1633 = vunpack.c.h.b16 %v1254
    %v1634 = vunpack.c.l.b16 %v1255
    %v1635 = vunpack.c.h.b16 %v1255
    %v1636 = vunpack.c.l.b16 %v1256
    %v1637 = vunpack.c.h.b16 %v1256
    %v1638 = vunpack.c.l.b16 %v1257
    %v1639 = vunpack.c.h.b16 %v1257
    %v1640 = vunpack.c.l.b16 %v1258
    %v1641 = vunpack.c.h.b16 %v1258
    %v1642 = vunpack.c.l.b16 %v1259
    %v1643 = vunpack.c.h.b16 %v1259
    %v1644 = vunpack.c.l.b16 %v1260
    %v1645 = vunpack.c.h.b16 %v1260
    %v1646 = vunpack.c.l.b16 %v1261
    %v1647 = vunpack.c.h.b16 %v1261
    %v1648 = vunpack.c.l.b16 %v1262
    %v1649 = vunpack.c.h.b16 %v1262
    %v1650 = vunpack.c.l.b16 %v1263
    %v1651 = vunpack.c.h.b16 %v1263
    %v1652 = vunpack.c.l.b16 %v1264
    %v1653 = vunpack.c.h.b16 %v1264
    %v1654 = vunpack.c.l.b16 %v1265
    %v1655 = vunpack.c.h.b16 %v1265
    %v1656 = vunpack.c.l.b16 %v1266
    %v1657 = vunpack.c.h.b16 %v1266
    %v1658 = vunpack.c.l.b16 %v1267
    %v1659 = vunpack.c.h.b16 %v1267
    %v1660 = vunpack.c.l.b16 %v1268
    %v1661 = vunpack.c.h.b16 %v1268
    %v1662 = vunpack.c.l.b16 %v1269
    %v1663 = vunpack.c.h.b16 %v1269
    %v1664 = vunpack.c.l.b16 %v1270
    %v1665 = vunpack.c.h.b16 %v1270
    %v1666 = vunpack.c.l.b16 %v1271
    %v1667 = vunpack.c.h.b16 %v1271
    %v1668 = vpack.c.b16 %v1414, %v1412
    %v1669 = vpack.c.b16 %v1415, %v1413
    %v1670 = vpack.c.b16 %v1418, %v1416
    %v1671 = vpack.c.b16 %v1419, %v1417
    %v1672 = vpack.c.b16 %v1422, %v1420
    %v1673 = vpack.c.b16 %v1423, %v1421
    %v1674 = vpack.c.b16 %v1426, %v1424
    %v1675 = vpack.c.b16 %v1427, %v1425
    %v1676 = vpack.c.b16 %v1430, %v1428
    %v1677 = vpack.c.b16 %v1431, %v1429
    %v1678 = vpack.c.b16 %v1434, %v1432
    %v1679 = vpack.c.b16 %v1435, %v1433
    %v1680 = vpack.c.b16 %v1438, %v1436
    %v1681 = vpack.c.b16 %v1439, %v1437
    %v1682 = vpack.c.b16 %v1442, %v1440
    %v1683 = vpack.c.b16 %v1443, %v1441
    %v1684 = vpack.c.b16 %v1446, %v1444
    %v1685 = vpack.c.b16 %v1447, %v1445
    %v1686 = vpack.c.b16 %v1450, %v1448
    %v1687 = vpack.c.b16 %v1451, %v1449
    %v1688 = vpack.c.b16 %v1454, %v1452
    %v1689 = vpack.c.b16 %v1455, %v1453
    %v1690 = vpack.c.b16 %v1458, %v1456
    %v1691 = vpack.c.b16 %v1459, %v1457
    %v1692 = vpack.c.b16 %v1462, %v1460
    %v1693 = vpack.c.b16 %v1463, %v1461
    %v1694 = vpack.c.b16 %v1466, %v1464
    %v1695 = vpack.c.b16 %v1467, %v1465
    %v1696 = vpack.c.b16 %v1470, %v1468
    %v1697 = vpack.c.b16 %v1471, %v1469
    %v1698 = vpack.c.b16 %v1474, %v1472
    %v1699 = vpack.c.b16 %v1475, %v1473
    %v1700 = vpack.c.b16 %v1478, %v1476
    %v1701 = vpack.c.b16 %v1479, %v1477
    %v1702 = vpack.c.b16 %v1482, %v1480
    %v1703 = vpack.c.b16 %v1483, %v1481
    %v1704 = vpack.c.b16 %v1486, %v1484
    %v1705 = vpack.c.b16 %v1487, %v1485
    %v1706 = vpack.c.b16 %v1490, %v1488
    %v1707 = vpack.c.b16 %v1491, %v1489
    %v1708 = vpack.c.b16 %v1494, %v1492
    %v1709 = vpack.c.b16 %v1495, %v1493
    %v1710 = vpack.c.b16 %v1498, %v1496
    %v1711 = vpack.c.b16 %v1499, %v1497
    %v1712 = vpack.c.b16 %v1502, %v1500
    %v1713 = vpack.c.b16 %v1503, %v1501
    %v1714 = vpack.c.b16 %v1506, %v1504
    %v1715 = vpack.c.b16 %v1507, %v1505
    %v1716 = vpack.c.b16 %v1510, %v1508
    %v1717 = vpack.c.b16 %v1511, %v1509
    %v1718 = vpack.c.b16 %v1514, %v1512
    %v1719 = vpack.c.b16 %v1515, %v1513
    %v1720 = vpack.c.b16 %v1518, %v1516
    %v1721 = vpack.c.b16 %v1519, %v1517
    %v1722 = vpack.c.b16 %v1522, %v1520
    %v1723 = vpack.c.b16 %v1523, %v1521
    %v1724 = vpack.c.b16 %v1526, %v1524
    %v1725 = vpack.c.b16 %v1527, %v1525
    %v1726 = vpack.c.b16 %v1530, %v1528
    %v1727 = vpack.c.b16 %v1531, %v1529
    %v1728 = vpack.c.b16 %v1534, %v1532
    %v1729 = vpack.c.b16 %v1535, %v1533
    %v1730 = vpack.c.b16 %v1538, %v1536
    %v1731 = vpack.c.b16 %v1539, %v1537
    %v1732 = vpack.c.b16 %v1542, %v1540
    %v1733 = vpack.c.b16 %v1543, %v1541
    %v1734 = vpack.c.b16 %v1546, %v1544
    %v1735 = vpack.c.b16 %v1547, %v1545
    %v1736 = vpack.c.b16 %v1550, %v1548
    %v1737 = vpack.c.b16 %v1551, %v1549
    %v1738 = vpack.c.b16 %v1554, %v1552
    %v1739 = vpack.c.b16 %v1555, %v1553
    %v1740 = vpack.c.b16 %v1558, %v1556
    %v1741 = vpack.c.b16 %v1559, %v1557
    %v1742 = vpack.c.b16 %v1562, %v1560
    %v1743 = vpack.c.b16 %v1563, %v1561
    %v1744 = vpack.c.b16 %v1566, %v1564
    %v1745 = vpack.c.b16 %v1567, %v1565
    %v1746 = vpack.c.b16 %v1570, %v1568
    %v1747 = vpack.c.b16 %v1571, %v1569
    %v1748 = vpack.c.b16 %v1574, %v1572
    %v1749 = vpack.c.b16 %v1575, %v1573
    %v1750 = vpack.c.b16 %v1578, %v1576
    %v1751 = vpack.c.b16 %v1579, %v1577
    %v1752 = vpack.c.b16 %v1582, %v1580
    %v1753 = vpack.c.b16 %v1583, %v1581
    %v1754 = vpack.c.b16 %v1586, %v1584
    %v1755 = vpack.c.b16 %v1587, %v1585
    %v1756 = vpack.c.b16 %v1590, %v1588
    %v1757 = vpack.c.b16 %v1591, %v1589
    %v1758 = vpack.c.b16 %v1594, %v1592
    %v1759 = vpack.c.b16 %v1595, %v1593
    %v1760 = vpack.c.b16 %v1598, %v1596
    %v1761 = vpack.c.b16 %v1599, %v1597
    %v1762 = vpack.c.b16 %v1602, %v1600
    %v1763 = vpack.c.b16 %v1603, %v1601
    %v1764 = vpack.c.b16 %v1606, %v1604
    %v1765 = vpack.c.b16 %v1607, %v1605
    %v1766 = vpack.c.b16 %v1610, %v1608
    %v1767 = vpack.c.b16 %v1611, %v1609
    %v1768 = vpack.c.b16 %v1614, %v1612
    %v1769 = vpack.c.b16 %v1615, %v1613
    %v1770 = vpack.c.b16 %v1618, %v1616
    %v1771 = vpack.c.b16 %v1619, %v1617
    %v1772 = vpack.c.b16 %v1622, %v1620
    %v1773 = vpack.c.b16 %v1623, %v1621
    %v1774 = vpack.c.b16 %v1626, %v1624
    %v1775 = vpack.c.b16 %v1627, %v1625
    %v1776 = vpack.c.b16 %v1630, %v1628
    %v1777 = vpack.c.b16 %v1631, %v1629
    %v1778 = vpack.c.b16 %v1634, %v1632
    %v1779 = vpack.c.b16 %v1635, %v1633
    %v1780 = vpack.c.b16 %v1638, %v1636
    %v1781 = vpack.c.b16 %v1639, %v1637
    %v1782 = vpack.c.b16 %v1642, %v1640
    %v1783 = vpack.c.b16 %v1643, %v1641
    %v1784 = vpack.c.b16 %v1646, %v1644
    %v1785 = vpack.c.b16 %v1647, %v1645
    %v1786 = vpack.c.b16 %v1650, %v1648
    %v1787 = vpack.c.b16 %v1651, %v1649
    %v1788 = vpack.c.b16 %v1654, %v1652
    %v1789 = vpack.c.b16 %v1655, %v1653
    %v1790 = vpack.c.b16 %v1658, %v1656
    %v1791 = vpack.c.b16 %v1659, %v1657
    %v1792 = vpack.c.b16 %v1662, %v1660
    %v1793 = vpack.c.b16 %v1663, %v1661
    %v1794 = vpack.c.b16 %v1666, %v1664
    %v1795 = vpack.c.b16 %v1667, %v1665
    %1924 = vmatprep.subr.bf16.mxu0 %v1669
    %1925 = vmatpush1.bf16.msra.mxu0 %v1668
    %1926 = vmatprep.subr.bf16.mxu0 %v1671
    %1927 = vmatpush1.bf16.msra.mxu0 %v1670
    %1928 = vmatprep.subr.bf16.mxu0 %v1673
    %1929 = vmatpush1.bf16.msra.mxu0 %v1672
    %1930 = vmatprep.subr.bf16.mxu0 %v1675
    %1931 = vmatpush1.bf16.msra.mxu0 %v1674
    %1932 = vmatprep.subr.bf16.mxu0 %v1677
    %1933 = vmatpush1.bf16.msra.mxu0 %v1676
    %1934 = vmatprep.subr.bf16.mxu0 %v1679
    %1935 = vmatpush1.bf16.msra.mxu0 %v1678
    %1936 = vmatprep.subr.bf16.mxu0 %v1681
    %1937 = vmatpush1.bf16.msra.mxu0 %v1680
    %1938 = vmatprep.subr.bf16.mxu0 %v1683
    %1939 = vmatpush1.bf16.msra.mxu0 %v1682
    %1940 = vmatprep.subr.bf16.mxu0 %v1685
    %1941 = vmatpush1.bf16.msra.mxu0 %v1684
    %1942 = vmatprep.subr.bf16.mxu0 %v1687
    %1943 = vmatpush1.bf16.msra.mxu0 %v1686
    %1944 = vmatprep.subr.bf16.mxu0 %v1689
    %1945 = vmatpush1.bf16.msra.mxu0 %v1688
    %1946 = vmatprep.subr.bf16.mxu0 %v1691
    %1947 = vmatpush1.bf16.msra.mxu0 %v1690
    %1948 = vmatprep.subr.bf16.mxu0 %v1693
    %1949 = vmatpush1.bf16.msra.mxu0 %v1692
    %1950 = vmatprep.subr.bf16.mxu0 %v1695
    %1951 = vmatpush1.bf16.msra.mxu0 %v1694
    %1952 = vmatprep.subr.bf16.mxu0 %v1697
    %1953 = vmatpush1.bf16.msra.mxu0 %v1696
    %1954 = vmatprep.subr.bf16.mxu0 %v1699
    %1955 = vmatpush1.bf16.msra.mxu0 %v1698
    %1956 = vmatprep.mubr.bf16.mxu0 %v1129
    %1957 = vmatmul.mubr.bf16.gmra.mrb[0].mxu0 %v1128
    %v1958 = vpop.f32.mrb[0].mxu0
    %v1959 = vadd.f32 %v1277, %v1958
    %v1960 = vpop.f32.mrb[0].mxu0
    %v1961 = vadd.f32 %v1281, %v1960
    %v1962 = vpop.f32.mrb[0].mxu0
    %v1963 = vadd.f32 %v1277, %v1962
    %v1964 = vpop.f32.mrb[0].mxu0
    %v1965 = vadd.f32 %v1281, %v1964
    %1966 = vmatprep.mubr.bf16.mxu0 %v1137
    %1967 = vmatmul.mubr.bf16.gmra.mrb[0].mxu0 %v1136
    %v1968 = vpop.f32.mrb[0].mxu0
    %v1969 = vadd.f32 %v1277, %v1968
    %v1970 = vpop.f32.mrb[0].mxu0
    %v1971 = vadd.f32 %v1281, %v1970
    %v1972 = vpop.f32.mrb[0].mxu0
    %v1973 = vadd.f32 %v1277, %v1972
    %v1974 = vpop.f32.mrb[0].mxu0
    %v1975 = vadd.f32 %v1281, %v1974
    %1976 = vdwg.mxu0
    %1977 = vmatprep.subr.bf16.mxu0 %v1701
    %1978 = vmatpush1.bf16.msra.mxu0 %v1700
    %1979 = vmatprep.subr.bf16.mxu0 %v1703
    %1980 = vmatpush1.bf16.msra.mxu0 %v1702
    %1981 = vmatprep.subr.bf16.mxu0 %v1705
    %1982 = vmatpush1.bf16.msra.mxu0 %v1704
    %1983 = vmatprep.subr.bf16.mxu0 %v1707
    %1984 = vmatpush1.bf16.msra.mxu0 %v1706
    %1985 = vmatprep.subr.bf16.mxu0 %v1709
    %1986 = vmatpush1.bf16.msra.mxu0 %v1708
    %1987 = vmatprep.subr.bf16.mxu0 %v1711
    %1988 = vmatpush1.bf16.msra.mxu0 %v1710
    %1989 = vmatprep.subr.bf16.mxu0 %v1713
    %1990 = vmatpush1.bf16.msra.mxu0 %v1712
    %1991 = vmatprep.subr.bf16.mxu0 %v1715
    %1992 = vmatpush1.bf16.msra.mxu0 %v1714
    %1993 = vmatprep.subr.bf16.mxu0 %v1717
    %1994 = vmatpush1.bf16.msra.mxu0 %v1716
    %1995 = vmatprep.subr.bf16.mxu0 %v1719
    %1996 = vmatpush1.bf16.msra.mxu0 %v1718
    %1997 = vmatprep.subr.bf16.mxu0 %v1721
    %1998 = vmatpush1.bf16.msra.mxu0 %v1720
    %1999 = vmatprep.subr.bf16.mxu0 %v1723
    %2000 = vmatpush1.bf16.msra.mxu0 %v1722
    %2001 = vmatprep.subr.bf16.mxu0 %v1725
    %2002 = vmatpush1.bf16.msra.mxu0 %v1724
    %2003 = vmatprep.subr.bf16.mxu0 %v1727
    %2004 = vmatpush1.bf16.msra.mxu0 %v1726
    %2005 = vmatprep.subr.bf16.mxu0 %v1729
    %2006 = vmatpush1.bf16.msra.mxu0 %v1728
    %2007 = vmatprep.subr.bf16.mxu0 %v1731
    %2008 = vmatpush1.bf16.msra.mxu0 %v1730
    %2009 = vmatprep.mubr.bf16.mxu0 %v1131
    %2010 = vmatmul.mubr.bf16.gmra.mrb[0].mxu0 %v1130
    %v2011 = vpop.f32.mrb[0].mxu0
    %v2012 = vadd.f32 %v1959, %v2011
    %v2013 = vpop.f32.mrb[0].mxu0
    %v2014 = vadd.f32 %v1961, %v2013
    %v2015 = vpop.f32.mrb[0].mxu0
    %v2016 = vadd.f32 %v1963, %v2015
    %v2017 = vpop.f32.mrb[0].mxu0
    %v2018 = vadd.f32 %v1965, %v2017
    %2019 = vmatprep.mubr.bf16.mxu0 %v1139
    %2020 = vmatmul.mubr.bf16.gmra.mrb[0].mxu0 %v1138
    %v2021 = vpop.f32.mrb[0].mxu0
    %v2022 = vadd.f32 %v1969, %v2021
    %v2023 = vpop.f32.mrb[0].mxu0
    %v2024 = vadd.f32 %v1971, %v2023
    %v2025 = vpop.f32.mrb[0].mxu0
    %v2026 = vadd.f32 %v1973, %v2025
    %v2027 = vpop.f32.mrb[0].mxu0
    %v2028 = vadd.f32 %v1975, %v2027
    %2029 = vdwg.mxu0
    %2030 = vmatprep.subr.bf16.mxu0 %v1733
    %2031 = vmatpush1.bf16.msra.mxu0 %v1732
    %2032 = vmatprep.subr.bf16.mxu0 %v1735
    %2033 = vmatpush1.bf16.msra.mxu0 %v1734
    %2034 = vmatprep.subr.bf16.mxu0 %v1737
    %2035 = vmatpush1.bf16.msra.mxu0 %v1736
    %2036 = vmatprep.subr.bf16.mxu0 %v1739
    %2037 = vmatpush1.bf16.msra.mxu0 %v1738
    %2038 = vmatprep.subr.bf16.mxu0 %v1741
    %2039 = vmatpush1.bf16.msra.mxu0 %v1740
    %2040 = vmatprep.subr.bf16.mxu0 %v1743
    %2041 = vmatpush1.bf16.msra.mxu0 %v1742
    %2042 = vmatprep.subr.bf16.mxu0 %v1745
    %2043 = vmatpush1.bf16.msra.mxu0 %v1744
    %2044 = vmatprep.subr.bf16.mxu0 %v1747
    %2045 = vmatpush1.bf16.msra.mxu0 %v1746
    %2046 = vmatprep.subr.bf16.mxu0 %v1749
    %2047 = vmatpush1.bf16.msra.mxu0 %v1748
    %2048 = vmatprep.subr.bf16.mxu0 %v1751
    %2049 = vmatpush1.bf16.msra.mxu0 %v1750
    %2050 = vmatprep.subr.bf16.mxu0 %v1753
    %2051 = vmatpush1.bf16.msra.mxu0 %v1752
    %2052 = vmatprep.subr.bf16.mxu0 %v1755
    %2053 = vmatpush1.bf16.msra.mxu0 %v1754
    %2054 = vmatprep.subr.bf16.mxu0 %v1757
    %2055 = vmatpush1.bf16.msra.mxu0 %v1756
    %2056 = vmatprep.subr.bf16.mxu0 %v1759
    %2057 = vmatpush1.bf16.msra.mxu0 %v1758
    %2058 = vmatprep.subr.bf16.mxu0 %v1761
    %2059 = vmatpush1.bf16.msra.mxu0 %v1760
    %2060 = vmatprep.subr.bf16.mxu0 %v1763
    %2061 = vmatpush1.bf16.msra.mxu0 %v1762
    %2062 = vmatprep.mubr.bf16.mxu0 %v1133
    %2063 = vmatmul.mubr.bf16.gmra.mrb[0].mxu0 %v1132
    %v2064 = vpop.f32.mrb[0].mxu0
    %v2065 = vadd.f32 %v2012, %v2064
    %v2066 = vpop.f32.mrb[0].mxu0
    %v2067 = vadd.f32 %v2014, %v2066
    %v2068 = vpop.f32.mrb[0].mxu0
    %v2069 = vadd.f32 %v2016, %v2068
    %v2070 = vpop.f32.mrb[0].mxu0
    %v2071 = vadd.f32 %v2018, %v2070
    %2072 = vmatprep.mubr.bf16.mxu0 %v1141
    %2073 = vmatmul.mubr.bf16.gmra.mrb[0].mxu0 %v1140
    %v2074 = vpop.f32.mrb[0].mxu0
    %v2075 = vadd.f32 %v2022, %v2074
    %v2076 = vpop.f32.mrb[0].mxu0
    %v2077 = vadd.f32 %v2024, %v2076
    %v2078 = vpop.f32.mrb[0].mxu0
    %v2079 = vadd.f32 %v2026, %v2078
    %v2080 = vpop.f32.mrb[0].mxu0
    %v2081 = vadd.f32 %v2028, %v2080
    %2082 = vdwg.mxu0
    %2083 = vmatprep.subr.bf16.mxu0 %v1765
    %2084 = vmatpush1.bf16.msra.mxu0 %v1764
    %2085 = vmatprep.subr.bf16.mxu0 %v1767
    %2086 = vmatpush1.bf16.msra.mxu0 %v1766
    %2087 = vmatprep.subr.bf16.mxu0 %v1769
    %2088 = vmatpush1.bf16.msra.mxu0 %v1768
    %2089 = vmatprep.subr.bf16.mxu0 %v1771
    %2090 = vmatpush1.bf16.msra.mxu0 %v1770
    %2091 = vmatprep.subr.bf16.mxu0 %v1773
    %2092 = vmatpush1.bf16.msra.mxu0 %v1772
    %2093 = vmatprep.subr.bf16.mxu0 %v1775
    %2094 = vmatpush1.bf16.msra.mxu0 %v1774
    %2095 = vmatprep.subr.bf16.mxu0 %v1777
    %2096 = vmatpush1.bf16.msra.mxu0 %v1776
    %2097 = vmatprep.subr.bf16.mxu0 %v1779
    %2098 = vmatpush1.bf16.msra.mxu0 %v1778
    %2099 = vmatprep.subr.bf16.mxu0 %v1781
    %2100 = vmatpush1.bf16.msra.mxu0 %v1780
    %2101 = vmatprep.subr.bf16.mxu0 %v1783
    %2102 = vmatpush1.bf16.msra.mxu0 %v1782
    %2103 = vmatprep.subr.bf16.mxu0 %v1785
    %2104 = vmatpush1.bf16.msra.mxu0 %v1784
    %2105 = vmatprep.subr.bf16.mxu0 %v1787
    %2106 = vmatpush1.bf16.msra.mxu0 %v1786
    %2107 = vmatprep.subr.bf16.mxu0 %v1789
    %2108 = vmatpush1.bf16.msra.mxu0 %v1788
    %2109 = vmatprep.subr.bf16.mxu0 %v1791
    %2110 = vmatpush1.bf16.msra.mxu0 %v1790
    %2111 = vmatprep.subr.bf16.mxu0 %v1793
    %2112 = vmatpush1.bf16.msra.mxu0 %v1792
    %2113 = vmatprep.subr.bf16.mxu0 %v1795
    %2114 = vmatpush1.bf16.msra.mxu0 %v1794
    %2115 = vmatprep.mubr.bf16.mxu0 %v1135
    %2116 = vmatmul.mubr.bf16.gmra.mrb[0].mxu0 %v1134
    %v2117 = vpop.f32.mrb[0].mxu0
    %v2118 = vadd.f32 %v2065, %v2117
    %v2119 = vpop.f32.mrb[0].mxu0
    %v2120 = vadd.f32 %v2067, %v2119
    %v2121 = vpop.f32.mrb[0].mxu0
    %v2122 = vadd.f32 %v2069, %v2121
    %v2123 = vpop.f32.mrb[0].mxu0
    %v2124 = vadd.f32 %v2071, %v2123
    %2125 = vmatprep.mubr.bf16.mxu0 %v1143
    %2126 = vmatmul.mubr.bf16.gmra.mrb[0].mxu0 %v1142
    %v2127 = vpop.f32.mrb[0].mxu0
    %v2128 = vadd.f32 %v2075, %v2127
    %v2129 = vpop.f32.mrb[0].mxu0
    %v2130 = vadd.f32 %v2077, %v2129
    %v2131 = vpop.f32.mrb[0].mxu0
    %v2132 = vadd.f32 %v2079, %v2131
    %v2133 = vpop.f32.mrb[0].mxu0
    %v2134 = vadd.f32 %v2081, %v2133
    %2135 = vdwg.mxu0
    %2136 = vst [vmem:[#allocation8] sm:$0xff] %v2118
    %2137 = vst [vmem:[#allocation8 + $0x8] sm:$0xff] %v2120
    %2138 = vst [vmem:[#allocation8 + $0x10] sm:$0xff] %v2122
    %2139 = vst [vmem:[#allocation8 + $0x18] sm:$0xff] %v2124
    %2140 = vst [vmem:[#allocation8 + $0x20] sm:$0xff] %v2128
    %2141 = vst [vmem:[#allocation8 + $0x28] sm:$0xff] %v2130
    %2142 = vst [vmem:[#allocation8 + $0x30] sm:$0xff] %v2132
    %2143 = vst [vmem:[#allocation8 + $0x38] sm:$0xff] %v2134
    // Predicated region
    $region34: #{feed_forward.1} parent=1 // pred_check
      _
    $region35: #{feed_forward.1} parent=1 // pred_check_branch
      %2145 = sbr.rel (0) target = $region37
    $region36: #{feed_forward.1} parent=1 // pred_region
      %s2147 = ssub.s32 1024, 1024
      %2148 = vsyncadd [#allocation4], %s2147
      %s2149 = sshll.u32 [#allocation8], 4
      %s2150 = int_to_ptr.vmem [resolvable:$true] %s2149
      %2155 = dma.vmem_to_hbm [thread:$0]  %s2150, 1024, %s5, [#allocation4], 256, 256, 16
    $region37: #{feed_forward.1} parent=1 // pred_fallthru
      _
    // Predicated region
    $region38: #{feed_forward.1} parent=1 // pred_check
      _
    $region39: #{feed_forward.1} parent=1 // pred_check_branch
      %2157 = sbr.rel (0) target = $region41
    $region40: #{feed_forward.1} parent=1 // pred_region
      %2158 = dma.done [#allocation4], 1024
    $region41: #{feed_forward.1} parent=1 // pred_fallthru
      _
    %2159 = vsyncpa [#allocation3], 1
    %2160 = vsyncpa [#allocation6], 1
    %2161 = vsyncpa [#allocation4], 1

</llo_original>
